<compile_context>
chip_gen: v5e
topology: v5e:2x2
jax: 0.10.0
libtpu: 0.0.40
codegen_flags: <defaults>
</compile_context>

<pallas_src>
import functools

import jax
import jax.numpy as jnp
from jax.experimental import pallas as pl
from jax.experimental.pallas import tpu as pltpu


_FUSED_MAX_IMG_F32_BYTES = 2 * 1024 * 1024   # fused path: one (C,H,W) image as f32
_VMEM_LIMIT_BYTES = 48 * 1024 * 1024         # safe on v5e/v6e (128 MiB) and v7x (64 MiB)


# --------------------------------------------------------------------------- #
# Shared in-kernel helpers: k-tap strip sum along one of the two minor axes.
# --------------------------------------------------------------------------- #
def _strip_bulk(xg, wts, shift_axis, pad, k, size):
    """Circular k-tap weighted sum via pltpu.roll.  Correct everywhere except
    the first/last `pad` positions along `shift_axis` (fixed up separately)."""
    acc = None
    for t in range(k):
        shift = (pad - t) % size
        xr = xg if shift == 0 else pltpu.roll(xg, shift, axis=shift_axis)
        term = xr * wts[t]
        acc = term if acc is None else acc + term
    return acc


def _boundary_cols(xg, wts, shift_axis, pad, k, size):
    """Exact reflection-padded values for the 2*pad boundary positions.

    Returns a list of (position, value) where value has extent 1 along
    `shift_axis`.  Duplicate reflected sources are merged so each boundary
    position needs at most k - pad single-column slices."""
    def refl(m):
        if m < 0:
            return -m
        if m >= size:
            return 2 * size - 2 - m
        return m

    def take(idx):
        if shift_axis == 2:
            return xg[:, :, idx:idx + 1]
        return xg[:, idx:idx + 1, :]

    out = []
    for j in list(range(pad)) + list(range(size - pad, size)):
        coeff = {}
        for t in range(k):
            src = refl(j + t - pad)
            coeff[src] = wts[t] if src not in coeff else coeff[src] + wts[t]
        val = None
        for src, wsum in coeff.items():
            term = take(src) * wsum
            val = term if val is None else val + term
        out.append((j, val))
    return out


# --------------------------------------------------------------------------- #
# Fused single-pass kernel: one batch image per grid step (1R + 1W of HBM).
# --------------------------------------------------------------------------- #
def _fused_kernel(w_ref, x_ref, o_ref, *, group, k, shift_axis, inv_hw):
    """w_ref : VMEM (C, group*k) f32   1x1-conv weight, transposed
       x_ref : VMEM (1, C, H, W)       one image
       o_ref : VMEM (1, C, H, W)
       shift_axis : axis of the (C, H, W) view the taps slide along (2 = W, 1 = H)."""
    pad = k // 2
    c = x_ref.shape[1]
    cpg = c // group

    x = x_ref[0].astype(jnp.float32)                 # cast once, (C, H, W)
    size = x.shape[shift_axis]

    # filter = sigmoid(conv1x1(avgpool(x))), fused in-kernel (no 2nd HBM read).
    s_w = jnp.sum(x, axis=2)                                  # (C, H)   lane reduce
    mean_c = jnp.sum(s_w, axis=1, keepdims=True) * inv_hw     # (C, 1)
    logits = jnp.sum(mean_c * w_ref[...], axis=0, keepdims=True)   # (1, group*k)
    filt = 1.0 / (1.0 + jnp.exp(-logits))                     # sigmoid, EUP slot

    for g in range(group):
        lo, hi = g * cpg, (g + 1) * cpg
        xg = x[lo:hi]
        # per-(group, tap) weights hoisted out of the tap loop; (1,1) broadcasts
        wts = [filt[0:1, g * k + t:g * k + t + 1] for t in range(k)]

        acc = _strip_bulk(xg, wts, shift_axis, pad, k, size)
        o_ref[0, lo:hi] = acc.astype(o_ref.dtype)

        for j, val in _boundary_cols(xg, wts, shift_axis, pad, k, size):
            if shift_axis == 2:
                o_ref[0, lo:hi, :, j:j + 1] = val.astype(o_ref.dtype)
            else:
                o_ref[0, lo:hi, j:j + 1, :] = val.astype(o_ref.dtype)


# --------------------------------------------------------------------------- #
# Tiled two-pass kernel: one (batch, group, spatial-tile) block per grid step.
# --------------------------------------------------------------------------- #
def _tiled_kernel(f_ref, x_ref, o_ref, *, group, k, shift_axis):
    """f_ref : SMEM (N*group*k,) f32   precomputed sigmoid strip filter (1-D, no padding blowup)
       x_ref : VMEM (1, cpg, T, W) or (1, cpg, H, T)
       o_ref : VMEM same shape as x_ref."""
    b = pl.program_id(0)
    g = pl.program_id(1)
    pad = k // 2

    x = x_ref[0].astype(jnp.float32)                 # cast once, (cpg, D1, D2)
    size = x.shape[shift_axis]

    base = b * (group * k) + g * k
    wts = [f_ref[base + t] for t in range(k)]        # scalar weights, hoisted

    acc = _strip_bulk(x, wts, shift_axis, pad, k, size)
    o_ref[0] = acc.astype(o_ref.dtype)               # one contiguous store per step

    for j, val in _boundary_cols(x, wts, shift_axis, pad, k, size):
        if shift_axis == 2:
            o_ref[0, :, :, j:j + 1] = val.astype(o_ref.dtype)
        else:
            o_ref[0, :, j:j + 1, :] = val.astype(o_ref.dtype)


def _pick_tile(size, bytes_per_unit, align, target_bytes):
    """Largest `align`-multiple tile whose input slab stays under target_bytes.
    The tile need not divide `size`: the grid uses pl.cdiv and Pallas masks the
    ragged last block (the strip sum never mixes data across the tiled axis)."""
    if size <= align or size * bytes_per_unit <= target_bytes:
        return size
    tile = (target_bytes // bytes_per_unit) // align * align
    return int(max(align, min(tile, size)))


def spatial_strip_att(x, conv_w, *, kernel=5, group=2, horizontal=True,
                      force_two_pass=False,
                      tile_target_bytes=4 * 1024 * 1024):
    """Pallas TPU forward of `spatial_strip_att`.

    x      : (N, C, H, W)
    conv_w : (group*kernel, C)  weight of nn.Conv2d(dim, group*kernel, 1, bias=False)
    """
    n, c, h, w = x.shape
    gk = group * kernel
    assert conv_w.shape == (gk, c), conv_w.shape
    assert c % group == 0
    shift_size = w if horizontal else h
    assert shift_size >= kernel, "strip length must be >= kernel for reflection pad"

    img_f32_bytes = c * h * w * 4
    # Fused path needs the whole image per grid step.  With N == 1 we prefer the
    # tiled path so the grid still has >= 2 parallel points (v7x: 2 TensorCores).
    use_fused = (not force_two_pass
                 and img_f32_bytes <= _FUSED_MAX_IMG_F32_BYTES
                 and n >= 2)

    if use_fused:
        kern = functools.partial(_fused_kernel, group=group, k=kernel,
                                 shift_axis=2 if horizontal else 1,
                                 inv_hw=1.0 / float(h * w))
        return pl.pallas_call(
            kern,
            out_shape=jax.ShapeDtypeStruct((n, c, h, w), x.dtype),
            grid=(n,),
            in_specs=[
                pl.BlockSpec((c, gk), lambda b: (0, 0)),            # tiny conv weight
                pl.BlockSpec((1, c, h, w), lambda b: (b, 0, 0, 0)),
            ],
            out_specs=pl.BlockSpec((1, c, h, w), lambda b: (b, 0, 0, 0)),
            compiler_params=pltpu.CompilerParams(
                dimension_semantics=("parallel",),
                vmem_limit_bytes=_VMEM_LIMIT_BYTES),
        )(conv_w.astype(jnp.float32).T, x)

    # ---- two-pass tiled path ------------------------------------------------
    # Pass 1 (plain XLA): tiny strip filter.  This is an extra full HBM read of
    # x; it is only taken when the image does not fit the fused single pass.
    mean_c = jnp.mean(x.astype(jnp.float32), axis=(2, 3))             # (N, C)
    filt = jax.nn.sigmoid(mean_c @ conv_w.astype(jnp.float32).T)      # (N, group*k)
    filt = filt.reshape(-1)                                           # 1-D -> tiny SMEM footprint

    cpg = c // group
    itemsize = jnp.dtype(x.dtype).itemsize
    if horizontal:
        shift_axis = 2                      # taps slide along W -> tile over H
        tile = _pick_tile(h, cpg * w * itemsize, align=8,
                          target_bytes=tile_target_bytes)
        grid = (n, group, pl.cdiv(h, tile))
        block = (1, cpg, tile, w)
        imap = lambda b, g, i: (b, g, i, 0)
    else:
        shift_axis = 1                      # taps slide along H -> tile over W (lane-dense, 128-aligned)
        tile = _pick_tile(w, cpg * h * itemsize, align=128,
                          target_bytes=tile_target_bytes)
        grid = (n, group, pl.cdiv(w, tile))
        block = (1, cpg, h, tile)
        imap = lambda b, g, i: (b, g, 0, i)

    # TODO(synk): for the horizontal path, W is the shift axis, so lane-padding W
    # to a multiple of 128 (to get unmasked stores) would change the reflection
    # boundary; it would require the kernel to track the true strip length.
    kern = functools.partial(_tiled_kernel, group=group, k=kernel,
                             shift_axis=shift_axis)
    return pl.pallas_call(
        kern,
        out_shape=jax.ShapeDtypeStruct((n, c, h, w), x.dtype),
        grid=grid,
        in_specs=[
            pl.BlockSpec(memory_space=pltpu.MemorySpace.SMEM),        # (N*group*k,) filter
            pl.BlockSpec(block, imap),
        ],
        out_specs=pl.BlockSpec(block, imap),
        compiler_params=pltpu.CompilerParams(
            dimension_semantics=("parallel", "parallel", "parallel"),
            vmem_limit_bytes=_VMEM_LIMIT_BYTES),
    )(filt, x)


def ref_forward(x, conv_w, group, k, horizontal=True):
    """Pure-JAX replica of the PyTorch forward."""
    n, c, h, w = x.shape
    pad = k // 2
    filt = jnp.mean(x.astype(jnp.float32), axis=(2, 3)) @ conv_w.astype(jnp.float32).T
    filt = jax.nn.sigmoid(filt).reshape(n, group, 1, k, 1)
    if horizontal:
        xp = jnp.pad(x, ((0, 0), (0, 0), (0, 0), (pad, pad)), mode="reflect")
        taps = jnp.stack([xp[:, :, :, t:t + w] for t in range(k)], axis=2)
    else:
        xp = jnp.pad(x, ((0, 0), (0, 0), (pad, pad), (0, 0)), mode="reflect")
        taps = jnp.stack([xp[:, :, t:t + h, :] for t in range(k)], axis=2)
    taps = taps.reshape(n, group, c // group, k, h * w).astype(jnp.float32)
    out = jnp.sum(taps * filt, axis=3).reshape(n, c, h, w)
    return out.astype(x.dtype)


if __name__ == "__main__":
    KERNEL, GROUP = 5, 2
    key = jax.random.PRNGKey(0)
    k0, k1, k2, k3 = jax.random.split(key, 4)

    # ---- small shapes: fused single-pass path (grid over batch) -------------
    N, C, H, W = 2, 4, 16, 16
    x = jax.random.normal(k0, (N, C, H, W), dtype=jnp.float32)
    # nn.Conv2d(dim, group*kernel, 1, bias=False) weight: (group*kernel, dim)
    conv_w = jax.random.normal(k1, (GROUP * KERNEL, C), dtype=jnp.float32) * 0.1

    out_h = jax.block_until_ready(
        spatial_strip_att(x, conv_w, kernel=KERNEL, group=GROUP, horizontal=True))
    out_v = jax.block_until_ready(
        spatial_strip_att(x, conv_w, kernel=KERNEL, group=GROUP, horizontal=False))
    ref_h = ref_forward(x, conv_w, GROUP, KERNEL, horizontal=True)
    ref_v = ref_forward(x, conv_w, GROUP, KERNEL, horizontal=False)
    assert out_h.shape == (N, C, H, W)
    assert jnp.allclose(out_h, ref_h, atol=1e-5, rtol=1e-5), "fused horizontal mismatch"
    assert jnp.allclose(out_v, ref_v, atol=1e-5, rtol=1e-5), "fused vertical mismatch"

    # ---- exercise the tiled two-pass fallback (ragged cdiv tiling) ----------
    N2, C2, H2, W2 = 1, 8, 72, 128
    x2 = jax.random.normal(k2, (N2, C2, H2, W2), dtype=jnp.float32)
    conv_w2 = jax.random.normal(k3, (GROUP * KERNEL, C2), dtype=jnp.float32) * 0.1

    out2_h = jax.block_until_ready(
        spatial_strip_att(x2, conv_w2, kernel=KERNEL, group=GROUP, horizontal=True,
                          force_two_pass=True, tile_target_bytes=64 * 1024))
    out2_v = jax.block_until_ready(
        spatial_strip_att(x2, conv_w2, kernel=KERNEL, group=GROUP, horizontal=False,
                          force_two_pass=True, tile_target_bytes=64 * 1024))
    ref2_h = ref_forward(x2, conv_w2, GROUP, KERNEL, horizontal=True)
    ref2_v = ref_forward(x2, conv_w2, GROUP, KERNEL, horizontal=False)
    assert jnp.allclose(out2_h, ref2_h, atol=1e-5, rtol=1e-5), "tiled horizontal mismatch"
    assert jnp.allclose(out2_v, ref2_v, atol=1e-5, rtol=1e-5), "tiled vertical mismatch"

    print("KERNEL_OK")
</pallas_src>

<mosaic_0001>
module attributes {stable_mosaic.version = 11 : i64} {
  func.func @_fused_kernel(%arg0: i32, %arg1: memref<4x10xf32, #tpu.memory_space<vmem>>, %arg2: memref<1x4x16x16xf32, #tpu.memory_space<vmem>>, %arg3: memref<1x4x16x16xf32, #tpu.memory_space<vmem>>) attributes {dimension_semantics = [#tpu.dimension_semantics<parallel>], iteration_bounds = array<i64: 2>, scalar_prefetch = 0 : i64, scratch_operands = 0 : i64, tpu.core_type = #tpu.core_type<tc>, window_params = [{pipeline_mode = #tpu.pipeline_mode<synchronous>, transform_indices = @transform_0, window_bounds = array<i64: 4, 10>}, {transform_indices = @transform_1, window_bounds = array<i64: 1, 4, 16, 16>}, {transform_indices = @transform_2, window_bounds = array<i64: 1, 4, 16, 16>}]} {
    %c0 = arith.constant 0 : index
    %c0_0 = arith.constant 0 : index
    %c0_1 = arith.constant 0 : index
    %c0_2 = arith.constant 0 : index
    %0 = vector.load %arg2[%c0, %c0_0, %c0_1, %c0_2] : memref<1x4x16x16xf32, #tpu.memory_space<vmem>>, vector<1x4x16x16xf32>
    %1 = vector.shape_cast %0 : vector<1x4x16x16xf32> to vector<4x16x16xf32>
    %cst = arith.constant dense<0.000000e+00> : vector<4x16xf32>
    %2 = vector.multi_reduction <add>, %1, %cst [2] : vector<4x16x16xf32> to vector<4x16xf32>
    %cst_3 = arith.constant dense<0.000000e+00> : vector<4xf32>
    %3 = vector.multi_reduction <add>, %2, %cst_3 [1] : vector<4x16xf32> to vector<4xf32>
    %4 = vector.shape_cast %3 : vector<4xf32> to vector<4x1xf32>
    %cst_4 = arith.constant 3.906250e-03 : f32
    %5 = vector.broadcast %cst_4 : f32 to vector<4x1xf32>
    %6 = arith.mulf %4, %5 : vector<4x1xf32>
    %c0_5 = arith.constant 0 : index
    %c0_6 = arith.constant 0 : index
    %7 = vector.load %arg1[%c0_5, %c0_6] : memref<4x10xf32, #tpu.memory_space<vmem>>, vector<4x10xf32>
    %8 = vector.broadcast %6 : vector<4x1xf32> to vector<4x10xf32>
    %9 = arith.mulf %8, %7 : vector<4x10xf32>
    %cst_7 = arith.constant dense<0.000000e+00> : vector<10xf32>
    %10 = vector.multi_reduction <add>, %9, %cst_7 [0] : vector<4x10xf32> to vector<10xf32>
    %11 = vector.shape_cast %10 : vector<10xf32> to vector<1x10xf32>
    %cst_8 = arith.constant 0.000000e+00 : f32
    %12 = vector.broadcast %cst_8 : f32 to vector<1x10xf32>
    %13 = arith.subf %12, %11 : vector<1x10xf32>
    %14 = math.exp %13 : vector<1x10xf32>
    %cst_9 = arith.constant 1.000000e+00 : f32
    %15 = vector.broadcast %cst_9 : f32 to vector<1x10xf32>
    %16 = arith.addf %15, %14 : vector<1x10xf32>
    %cst_10 = arith.constant 1.000000e+00 : f32
    %17 = vector.broadcast %cst_10 : f32 to vector<1x10xf32>
    %18 = arith.divf %17, %16 : vector<1x10xf32>
    %19 = vector.extract_strided_slice %1 {offsets = [0, 0, 0], sizes = [2, 16, 16], strides = [1, 1, 1]} : vector<4x16x16xf32> to vector<2x16x16xf32>
    %20 = vector.extract_strided_slice %18 {offsets = [0, 0], sizes = [1, 1], strides = [1, 1]} : vector<1x10xf32> to vector<1x1xf32>
    %21 = vector.extract_strided_slice %18 {offsets = [0, 1], sizes = [1, 1], strides = [1, 1]} : vector<1x10xf32> to vector<1x1xf32>
    %22 = vector.extract_strided_slice %18 {offsets = [0, 2], sizes = [1, 1], strides = [1, 1]} : vector<1x10xf32> to vector<1x1xf32>
    %23 = vector.extract_strided_slice %18 {offsets = [0, 3], sizes = [1, 1], strides = [1, 1]} : vector<1x10xf32> to vector<1x1xf32>
    %24 = vector.extract_strided_slice %18 {offsets = [0, 4], sizes = [1, 1], strides = [1, 1]} : vector<1x10xf32> to vector<1x1xf32>
    %c2_i32 = arith.constant 2 : i32
    %25 = tpu.dynamic_rotate %19 by %c2_i32 dim 2 : vector<2x16x16xf32>, i32 -> vector<2x16x16xf32>
    %26 = vector.shape_cast %20 : vector<1x1xf32> to vector<1x1x1xf32>
    %27 = vector.broadcast %26 : vector<1x1x1xf32> to vector<2x16x16xf32>
    %28 = arith.mulf %25, %27 : vector<2x16x16xf32>
    %c1_i32 = arith.constant 1 : i32
    %29 = tpu.dynamic_rotate %19 by %c1_i32 dim 2 : vector<2x16x16xf32>, i32 -> vector<2x16x16xf32>
    %30 = vector.shape_cast %21 : vector<1x1xf32> to vector<1x1x1xf32>
    %31 = vector.broadcast %30 : vector<1x1x1xf32> to vector<2x16x16xf32>
    %32 = arith.mulf %29, %31 : vector<2x16x16xf32>
    %33 = arith.addf %28, %32 : vector<2x16x16xf32>
    %34 = vector.shape_cast %22 : vector<1x1xf32> to vector<1x1x1xf32>
    %35 = vector.broadcast %34 : vector<1x1x1xf32> to vector<2x16x16xf32>
    %36 = arith.mulf %19, %35 : vector<2x16x16xf32>
    %37 = arith.addf %33, %36 : vector<2x16x16xf32>
    %c15_i32 = arith.constant 15 : i32
    %38 = tpu.dynamic_rotate %19 by %c15_i32 dim 2 : vector<2x16x16xf32>, i32 -> vector<2x16x16xf32>
    %39 = vector.shape_cast %23 : vector<1x1xf32> to vector<1x1x1xf32>
    %40 = vector.broadcast %39 : vector<1x1x1xf32> to vector<2x16x16xf32>
    %41 = arith.mulf %38, %40 : vector<2x16x16xf32>
    %42 = arith.addf %37, %41 : vector<2x16x16xf32>
    %c14_i32 = arith.constant 14 : i32
    %43 = tpu.dynamic_rotate %19 by %c14_i32 dim 2 : vector<2x16x16xf32>, i32 -> vector<2x16x16xf32>
    %44 = vector.shape_cast %24 : vector<1x1xf32> to vector<1x1x1xf32>
    %45 = vector.broadcast %44 : vector<1x1x1xf32> to vector<2x16x16xf32>
    %46 = arith.mulf %43, %45 : vector<2x16x16xf32>
    %47 = arith.addf %42, %46 : vector<2x16x16xf32>
    %c0_11 = arith.constant 0 : index
    %c0_12 = arith.constant 0 : index
    %c0_13 = arith.constant 0 : index
    %c0_14 = arith.constant 0 : index
    %48 = vector.load %arg3[%c0_11, %c0_12, %c0_13, %c0_14] : memref<1x4x16x16xf32, #tpu.memory_space<vmem>>, vector<1x2x16x16xf32>
    %49 = vector.shape_cast %48 : vector<1x2x16x16xf32> to vector<2x16x16xf32>
    %50 = vector.shape_cast %47 : vector<2x16x16xf32> to vector<1x2x16x16xf32>
    tpu.vector_store %arg3[%c0_11, %c0_12, %c0_13, %c0_14], %50 {strides = array<i32>} : memref<1x4x16x16xf32, #tpu.memory_space<vmem>>, vector<1x2x16x16xf32>,
    %51 = arith.addf %21, %23 : vector<1x1xf32>
    %52 = arith.addf %20, %24 : vector<1x1xf32>
    %53 = vector.extract_strided_slice %19 {offsets = [0, 0, 2], sizes = [2, 16, 1], strides = [1, 1, 1]} : vector<2x16x16xf32> to vector<2x16x1xf32>
    %54 = vector.shape_cast %52 : vector<1x1xf32> to vector<1x1x1xf32>
    %55 = vector.broadcast %54 : vector<1x1x1xf32> to vector<2x16x1xf32>
    %56 = arith.mulf %53, %55 : vector<2x16x1xf32>
    %57 = vector.extract_strided_slice %19 {offsets = [0, 0, 1], sizes = [2, 16, 1], strides = [1, 1, 1]} : vector<2x16x16xf32> to vector<2x16x1xf32>
    %58 = vector.shape_cast %51 : vector<1x1xf32> to vector<1x1x1xf32>
    %59 = vector.broadcast %58 : vector<1x1x1xf32> to vector<2x16x1xf32>
    %60 = arith.mulf %57, %59 : vector<2x16x1xf32>
    %61 = arith.addf %56, %60 : vector<2x16x1xf32>
    %62 = vector.extract_strided_slice %19 {offsets = [0, 0, 0], sizes = [2, 16, 1], strides = [1, 1, 1]} : vector<2x16x16xf32> to vector<2x16x1xf32>
    %63 = vector.shape_cast %22 : vector<1x1xf32> to vector<1x1x1xf32>
    %64 = vector.broadcast %63 : vector<1x1x1xf32> to vector<2x16x1xf32>
    %65 = arith.mulf %62, %64 : vector<2x16x1xf32>
    %66 = arith.addf %61, %65 : vector<2x16x1xf32>
    %67 = arith.addf %20, %22 : vector<1x1xf32>
    %68 = vector.extract_strided_slice %19 {offsets = [0, 0, 1], sizes = [2, 16, 1], strides = [1, 1, 1]} : vector<2x16x16xf32> to vector<2x16x1xf32>
    %69 = vector.shape_cast %67 : vector<1x1xf32> to vector<1x1x1xf32>
    %70 = vector.broadcast %69 : vector<1x1x1xf32> to vector<2x16x1xf32>
    %71 = arith.mulf %68, %70 : vector<2x16x1xf32>
    %72 = vector.extract_strided_slice %19 {offsets = [0, 0, 0], sizes = [2, 16, 1], strides = [1, 1, 1]} : vector<2x16x16xf32> to vector<2x16x1xf32>
    %73 = vector.shape_cast %21 : vector<1x1xf32> to vector<1x1x1xf32>
    %74 = vector.broadcast %73 : vector<1x1x1xf32> to vector<2x16x1xf32>
    %75 = arith.mulf %72, %74 : vector<2x16x1xf32>
    %76 = arith.addf %71, %75 : vector<2x16x1xf32>
    %77 = vector.extract_strided_slice %19 {offsets = [0, 0, 2], sizes = [2, 16, 1], strides = [1, 1, 1]} : vector<2x16x16xf32> to vector<2x16x1xf32>
    %78 = vector.shape_cast %23 : vector<1x1xf32> to vector<1x1x1xf32>
    %79 = vector.broadcast %78 : vector<1x1x1xf32> to vector<2x16x1xf32>
    %80 = arith.mulf %77, %79 : vector<2x16x1xf32>
    %81 = arith.addf %76, %80 : vector<2x16x1xf32>
    %82 = vector.extract_strided_slice %19 {offsets = [0, 0, 3], sizes = [2, 16, 1], strides = [1, 1, 1]} : vector<2x16x16xf32> to vector<2x16x1xf32>
    %83 = vector.shape_cast %24 : vector<1x1xf32> to vector<1x1x1xf32>
    %84 = vector.broadcast %83 : vector<1x1x1xf32> to vector<2x16x1xf32>
    %85 = arith.mulf %82, %84 : vector<2x16x1xf32>
    %86 = arith.addf %81, %85 : vector<2x16x1xf32>
    %87 = arith.addf %22, %24 : vector<1x1xf32>
    %88 = vector.extract_strided_slice %19 {offsets = [0, 0, 12], sizes = [2, 16, 1], strides = [1, 1, 1]} : vector<2x16x16xf32> to vector<2x16x1xf32>
    %89 = vector.shape_cast %20 : vector<1x1xf32> to vector<1x1x1xf32>
    %90 = vector.broadcast %89 : vector<1x1x1xf32> to vector<2x16x1xf32>
    %91 = arith.mulf %88, %90 : vector<2x16x1xf32>
    %92 = vector.extract_strided_slice %19 {offsets = [0, 0, 13], sizes = [2, 16, 1], strides = [1, 1, 1]} : vector<2x16x16xf32> to vector<2x16x1xf32>
    %93 = vector.shape_cast %21 : vector<1x1xf32> to vector<1x1x1xf32>
    %94 = vector.broadcast %93 : vector<1x1x1xf32> to vector<2x16x1xf32>
    %95 = arith.mulf %92, %94 : vector<2x16x1xf32>
    %96 = arith.addf %91, %95 : vector<2x16x1xf32>
    %97 = vector.extract_strided_slice %19 {offsets = [0, 0, 14], sizes = [2, 16, 1], strides = [1, 1, 1]} : vector<2x16x16xf32> to vector<2x16x1xf32>
    %98 = vector.shape_cast %87 : vector<1x1xf32> to vector<1x1x1xf32>
    %99 = vector.broadcast %98 : vector<1x1x1xf32> to vector<2x16x1xf32>
    %100 = arith.mulf %97, %99 : vector<2x16x1xf32>
    %101 = arith.addf %96, %100 : vector<2x16x1xf32>
    %102 = vector.extract_strided_slice %19 {offsets = [0, 0, 15], sizes = [2, 16, 1], strides = [1, 1, 1]} : vector<2x16x16xf32> to vector<2x16x1xf32>
    %103 = vector.shape_cast %23 : vector<1x1xf32> to vector<1x1x1xf32>
    %104 = vector.broadcast %103 : vector<1x1x1xf32> to vector<2x16x1xf32>
    %105 = arith.mulf %102, %104 : vector<2x16x1xf32>
    %106 = arith.addf %101, %105 : vector<2x16x1xf32>
    %107 = arith.addf %21, %23 : vector<1x1xf32>
    %108 = arith.addf %20, %24 : vector<1x1xf32>
    %109 = vector.extract_strided_slice %19 {offsets = [0, 0, 13], sizes = [2, 16, 1], strides = [1, 1, 1]} : vector<2x16x16xf32> to vector<2x16x1xf32>
    %110 = vector.shape_cast %108 : vector<1x1xf32> to vector<1x1x1xf32>
    %111 = vector.broadcast %110 : vector<1x1x1xf32> to vector<2x16x1xf32>
    %112 = arith.mulf %109, %111 : vector<2x16x1xf32>
    %113 = vector.extract_strided_slice %19 {offsets = [0, 0, 14], sizes = [2, 16, 1], strides = [1, 1, 1]} : vector<2x16x16xf32> to vector<2x16x1xf32>
    %114 = vector.shape_cast %107 : vector<1x1xf32> to vector<1x1x1xf32>
    %115 = vector.broadcast %114 : vector<1x1x1xf32> to vector<2x16x1xf32>
    %116 = arith.mulf %113, %115 : vector<2x16x1xf32>
    %117 = arith.addf %112, %116 : vector<2x16x1xf32>
    %118 = vector.extract_strided_slice %19 {offsets = [0, 0, 15], sizes = [2, 16, 1], strides = [1, 1, 1]} : vector<2x16x16xf32> to vector<2x16x1xf32>
    %119 = vector.shape_cast %22 : vector<1x1xf32> to vector<1x1x1xf32>
    %120 = vector.broadcast %119 : vector<1x1x1xf32> to vector<2x16x1xf32>
    %121 = arith.mulf %118, %120 : vector<2x16x1xf32>
    %122 = arith.addf %117, %121 : vector<2x16x1xf32>
    %c0_15 = arith.constant 0 : index
    %c0_16 = arith.constant 0 : index
    %c0_17 = arith.constant 0 : index
    %c0_18 = arith.constant 0 : index
    %123 = vector.load %arg3[%c0_15, %c0_16, %c0_17, %c0_18] : memref<1x4x16x16xf32, #tpu.memory_space<vmem>>, vector<1x2x16x1xf32>
    %124 = vector.shape_cast %123 : vector<1x2x16x1xf32> to vector<2x16x1xf32>
    %125 = vector.shape_cast %66 : vector<2x16x1xf32> to vector<1x2x16x1xf32>
    tpu.vector_store %arg3[%c0_15, %c0_16, %c0_17, %c0_18], %125 {strides = array<i32>} : memref<1x4x16x16xf32, #tpu.memory_space<vmem>>, vector<1x2x16x1xf32>,
    %c0_19 = arith.constant 0 : index
    %c0_20 = arith.constant 0 : index
    %c0_21 = arith.constant 0 : index
    %c1 = arith.constant 1 : index
    %126 = vector.load %arg3[%c0_19, %c0_20, %c0_21, %c1] : memref<1x4x16x16xf32, #tpu.memory_space<vmem>>, vector<1x2x16x1xf32>
    %127 = vector.shape_cast %126 : vector<1x2x16x1xf32> to vector<2x16x1xf32>
    %128 = vector.shape_cast %86 : vector<2x16x1xf32> to vector<1x2x16x1xf32>
    tpu.vector_store %arg3[%c0_19, %c0_20, %c0_21, %c1], %128 {strides = array<i32>} : memref<1x4x16x16xf32, #tpu.memory_space<vmem>>, vector<1x2x16x1xf32>,
    %c0_22 = arith.constant 0 : index
    %c0_23 = arith.constant 0 : index
    %c0_24 = arith.constant 0 : index
    %c14 = arith.constant 14 : index
    %129 = vector.load %arg3[%c0_22, %c0_23, %c0_24, %c14] : memref<1x4x16x16xf32, #tpu.memory_space<vmem>>, vector<1x2x16x1xf32>
    %130 = vector.shape_cast %129 : vector<1x2x16x1xf32> to vector<2x16x1xf32>
    %131 = vector.shape_cast %106 : vector<2x16x1xf32> to vector<1x2x16x1xf32>
    tpu.vector_store %arg3[%c0_22, %c0_23, %c0_24, %c14], %131 {strides = array<i32>} : memref<1x4x16x16xf32, #tpu.memory_space<vmem>>, vector<1x2x16x1xf32>,
    %c0_25 = arith.constant 0 : index
    %c0_26 = arith.constant 0 : index
    %c0_27 = arith.constant 0 : index
    %c15 = arith.constant 15 : index
    %132 = vector.load %arg3[%c0_25, %c0_26, %c0_27, %c15] : memref<1x4x16x16xf32, #tpu.memory_space<vmem>>, vector<1x2x16x1xf32>
    %133 = vector.shape_cast %132 : vector<1x2x16x1xf32> to vector<2x16x1xf32>
    %134 = vector.shape_cast %122 : vector<2x16x1xf32> to vector<1x2x16x1xf32>
    tpu.vector_store %arg3[%c0_25, %c0_26, %c0_27, %c15], %134 {strides = array<i32>} : memref<1x4x16x16xf32, #tpu.memory_space<vmem>>, vector<1x2x16x1xf32>,
    %135 = vector.extract_strided_slice %1 {offsets = [2, 0, 0], sizes = [2, 16, 16], strides = [1, 1, 1]} : vector<4x16x16xf32> to vector<2x16x16xf32>
    %136 = vector.extract_strided_slice %18 {offsets = [0, 5], sizes = [1, 1], strides = [1, 1]} : vector<1x10xf32> to vector<1x1xf32>
    %137 = vector.extract_strided_slice %18 {offsets = [0, 6], sizes = [1, 1], strides = [1, 1]} : vector<1x10xf32> to vector<1x1xf32>
    %138 = vector.extract_strided_slice %18 {offsets = [0, 7], sizes = [1, 1], strides = [1, 1]} : vector<1x10xf32> to vector<1x1xf32>
    %139 = vector.extract_strided_slice %18 {offsets = [0, 8], sizes = [1, 1], strides = [1, 1]} : vector<1x10xf32> to vector<1x1xf32>
    %140 = vector.extract_strided_slice %18 {offsets = [0, 9], sizes = [1, 1], strides = [1, 1]} : vector<1x10xf32> to vector<1x1xf32>
    %c2_i32_28 = arith.constant 2 : i32
    %141 = tpu.dynamic_rotate %135 by %c2_i32_28 dim 2 : vector<2x16x16xf32>, i32 -> vector<2x16x16xf32>
    %142 = vector.shape_cast %136 : vector<1x1xf32> to vector<1x1x1xf32>
    %143 = vector.broadcast %142 : vector<1x1x1xf32> to vector<2x16x16xf32>
    %144 = arith.mulf %141, %143 : vector<2x16x16xf32>
    %c1_i32_29 = arith.constant 1 : i32
    %145 = tpu.dynamic_rotate %135 by %c1_i32_29 dim 2 : vector<2x16x16xf32>, i32 -> vector<2x16x16xf32>
    %146 = vector.shape_cast %137 : vector<1x1xf32> to vector<1x1x1xf32>
    %147 = vector.broadcast %146 : vector<1x1x1xf32> to vector<2x16x16xf32>
    %148 = arith.mulf %145, %147 : vector<2x16x16xf32>
    %149 = arith.addf %144, %148 : vector<2x16x16xf32>
    %150 = vector.shape_cast %138 : vector<1x1xf32> to vector<1x1x1xf32>
    %151 = vector.broadcast %150 : vector<1x1x1xf32> to vector<2x16x16xf32>
    %152 = arith.mulf %135, %151 : vector<2x16x16xf32>
    %153 = arith.addf %149, %152 : vector<2x16x16xf32>
    %c15_i32_30 = arith.constant 15 : i32
    %154 = tpu.dynamic_rotate %135 by %c15_i32_30 dim 2 : vector<2x16x16xf32>, i32 -> vector<2x16x16xf32>
    %155 = vector.shape_cast %139 : vector<1x1xf32> to vector<1x1x1xf32>
    %156 = vector.broadcast %155 : vector<1x1x1xf32> to vector<2x16x16xf32>
    %157 = arith.mulf %154, %156 : vector<2x16x16xf32>
    %158 = arith.addf %153, %157 : vector<2x16x16xf32>
    %c14_i32_31 = arith.constant 14 : i32
    %159 = tpu.dynamic_rotate %135 by %c14_i32_31 dim 2 : vector<2x16x16xf32>, i32 -> vector<2x16x16xf32>
    %160 = vector.shape_cast %140 : vector<1x1xf32> to vector<1x1x1xf32>
    %161 = vector.broadcast %160 : vector<1x1x1xf32> to vector<2x16x16xf32>
    %162 = arith.mulf %159, %161 : vector<2x16x16xf32>
    %163 = arith.addf %158, %162 : vector<2x16x16xf32>
    %c0_32 = arith.constant 0 : index
    %c2 = arith.constant 2 : index
    %c0_33 = arith.constant 0 : index
    %c0_34 = arith.constant 0 : index
    %164 = vector.load %arg3[%c0_32, %c2, %c0_33, %c0_34] : memref<1x4x16x16xf32, #tpu.memory_space<vmem>>, vector<1x2x16x16xf32>
    %165 = vector.shape_cast %164 : vector<1x2x16x16xf32> to vector<2x16x16xf32>
    %166 = vector.shape_cast %163 : vector<2x16x16xf32> to vector<1x2x16x16xf32>
    tpu.vector_store %arg3[%c0_32, %c2, %c0_33, %c0_34], %166 {strides = array<i32>} : memref<1x4x16x16xf32, #tpu.memory_space<vmem>>, vector<1x2x16x16xf32>,
    %167 = arith.addf %137, %139 : vector<1x1xf32>
    %168 = arith.addf %136, %140 : vector<1x1xf32>
    %169 = vector.extract_strided_slice %135 {offsets = [0, 0, 2], sizes = [2, 16, 1], strides = [1, 1, 1]} : vector<2x16x16xf32> to vector<2x16x1xf32>
    %170 = vector.shape_cast %168 : vector<1x1xf32> to vector<1x1x1xf32>
    %171 = vector.broadcast %170 : vector<1x1x1xf32> to vector<2x16x1xf32>
    %172 = arith.mulf %169, %171 : vector<2x16x1xf32>
    %173 = vector.extract_strided_slice %135 {offsets = [0, 0, 1], sizes = [2, 16, 1], strides = [1, 1, 1]} : vector<2x16x16xf32> to vector<2x16x1xf32>
    %174 = vector.shape_cast %167 : vector<1x1xf32> to vector<1x1x1xf32>
    %175 = vector.broadcast %174 : vector<1x1x1xf32> to vector<2x16x1xf32>
    %176 = arith.mulf %173, %175 : vector<2x16x1xf32>
    %177 = arith.addf %172, %176 : vector<2x16x1xf32>
    %178 = vector.extract_strided_slice %135 {offsets = [0, 0, 0], sizes = [2, 16, 1], strides = [1, 1, 1]} : vector<2x16x16xf32> to vector<2x16x1xf32>
    %179 = vector.shape_cast %138 : vector<1x1xf32> to vector<1x1x1xf32>
    %180 = vector.broadcast %179 : vector<1x1x1xf32> to vector<2x16x1xf32>
    %181 = arith.mulf %178, %180 : vector<2x16x1xf32>
    %182 = arith.addf %177, %181 : vector<2x16x1xf32>
    %183 = arith.addf %136, %138 : vector<1x1xf32>
    %184 = vector.extract_strided_slice %135 {offsets = [0, 0, 1], sizes = [2, 16, 1], strides = [1, 1, 1]} : vector<2x16x16xf32> to vector<2x16x1xf32>
    %185 = vector.shape_cast %183 : vector<1x1xf32> to vector<1x1x1xf32>
    %186 = vector.broadcast %185 : vector<1x1x1xf32> to vector<2x16x1xf32>
    %187 = arith.mulf %184, %186 : vector<2x16x1xf32>
    %188 = vector.extract_strided_slice %135 {offsets = [0, 0, 0], sizes = [2, 16, 1], strides = [1, 1, 1]} : vector<2x16x16xf32> to vector<2x16x1xf32>
    %189 = vector.shape_cast %137 : vector<1x1xf32> to vector<1x1x1xf32>
    %190 = vector.broadcast %189 : vector<1x1x1xf32> to vector<2x16x1xf32>
    %191 = arith.mulf %188, %190 : vector<2x16x1xf32>
    %192 = arith.addf %187, %191 : vector<2x16x1xf32>
    %193 = vector.extract_strided_slice %135 {offsets = [0, 0, 2], sizes = [2, 16, 1], strides = [1, 1, 1]} : vector<2x16x16xf32> to vector<2x16x1xf32>
    %194 = vector.shape_cast %139 : vector<1x1xf32> to vector<1x1x1xf32>
    %195 = vector.broadcast %194 : vector<1x1x1xf32> to vector<2x16x1xf32>
    %196 = arith.mulf %193, %195 : vector<2x16x1xf32>
    %197 = arith.addf %192, %196 : vector<2x16x1xf32>
    %198 = vector.extract_strided_slice %135 {offsets = [0, 0, 3], sizes = [2, 16, 1], strides = [1, 1, 1]} : vector<2x16x16xf32> to vector<2x16x1xf32>
    %199 = vector.shape_cast %140 : vector<1x1xf32> to vector<1x1x1xf32>
    %200 = vector.broadcast %199 : vector<1x1x1xf32> to vector<2x16x1xf32>
    %201 = arith.mulf %198, %200 : vector<2x16x1xf32>
    %202 = arith.addf %197, %201 : vector<2x16x1xf32>
    %203 = arith.addf %138, %140 : vector<1x1xf32>
    %204 = vector.extract_strided_slice %135 {offsets = [0, 0, 12], sizes = [2, 16, 1], strides = [1, 1, 1]} : vector<2x16x16xf32> to vector<2x16x1xf32>
    %205 = vector.shape_cast %136 : vector<1x1xf32> to vector<1x1x1xf32>
    %206 = vector.broadcast %205 : vector<1x1x1xf32> to vector<2x16x1xf32>
    %207 = arith.mulf %204, %206 : vector<2x16x1xf32>
    %208 = vector.extract_strided_slice %135 {offsets = [0, 0, 13], sizes = [2, 16, 1], strides = [1, 1, 1]} : vector<2x16x16xf32> to vector<2x16x1xf32>
    %209 = vector.shape_cast %137 : vector<1x1xf32> to vector<1x1x1xf32>
    %210 = vector.broadcast %209 : vector<1x1x1xf32> to vector<2x16x1xf32>
    %211 = arith.mulf %208, %210 : vector<2x16x1xf32>
    %212 = arith.addf %207, %211 : vector<2x16x1xf32>
    %213 = vector.extract_strided_slice %135 {offsets = [0, 0, 14], sizes = [2, 16, 1], strides = [1, 1, 1]} : vector<2x16x16xf32> to vector<2x16x1xf32>
    %214 = vector.shape_cast %203 : vector<1x1xf32> to vector<1x1x1xf32>
    %215 = vector.broadcast %214 : vector<1x1x1xf32> to vector<2x16x1xf32>
    %216 = arith.mulf %213, %215 : vector<2x16x1xf32>
    %217 = arith.addf %212, %216 : vector<2x16x1xf32>
    %218 = vector.extract_strided_slice %135 {offsets = [0, 0, 15], sizes = [2, 16, 1], strides = [1, 1, 1]} : vector<2x16x16xf32> to vector<2x16x1xf32>
    %219 = vector.shape_cast %139 : vector<1x1xf32> to vector<1x1x1xf32>
    %220 = vector.broadcast %219 : vector<1x1x1xf32> to vector<2x16x1xf32>
    %221 = arith.mulf %218, %220 : vector<2x16x1xf32>
    %222 = arith.addf %217, %221 : vector<2x16x1xf32>
    %223 = arith.addf %137, %139 : vector<1x1xf32>
    %224 = arith.addf %136, %140 : vector<1x1xf32>
    %225 = vector.extract_strided_slice %135 {offsets = [0, 0, 13], sizes = [2, 16, 1], strides = [1, 1, 1]} : vector<2x16x16xf32> to vector<2x16x1xf32>
    %226 = vector.shape_cast %224 : vector<1x1xf32> to vector<1x1x1xf32>
    %227 = vector.broadcast %226 : vector<1x1x1xf32> to vector<2x16x1xf32>
    %228 = arith.mulf %225, %227 : vector<2x16x1xf32>
    %229 = vector.extract_strided_slice %135 {offsets = [0, 0, 14], sizes = [2, 16, 1], strides = [1, 1, 1]} : vector<2x16x16xf32> to vector<2x16x1xf32>
    %230 = vector.shape_cast %223 : vector<1x1xf32> to vector<1x1x1xf32>
    %231 = vector.broadcast %230 : vector<1x1x1xf32> to vector<2x16x1xf32>
    %232 = arith.mulf %229, %231 : vector<2x16x1xf32>
    %233 = arith.addf %228, %232 : vector<2x16x1xf32>
    %234 = vector.extract_strided_slice %135 {offsets = [0, 0, 15], sizes = [2, 16, 1], strides = [1, 1, 1]} : vector<2x16x16xf32> to vector<2x16x1xf32>
    %235 = vector.shape_cast %138 : vector<1x1xf32> to vector<1x1x1xf32>
    %236 = vector.broadcast %235 : vector<1x1x1xf32> to vector<2x16x1xf32>
    %237 = arith.mulf %234, %236 : vector<2x16x1xf32>
    %238 = arith.addf %233, %237 : vector<2x16x1xf32>
    %c0_35 = arith.constant 0 : index
    %c2_36 = arith.constant 2 : index
    %c0_37 = arith.constant 0 : index
    %c0_38 = arith.constant 0 : index
    %239 = vector.load %arg3[%c0_35, %c2_36, %c0_37, %c0_38] : memref<1x4x16x16xf32, #tpu.memory_space<vmem>>, vector<1x2x16x1xf32>
    %240 = vector.shape_cast %239 : vector<1x2x16x1xf32> to vector<2x16x1xf32>
    %241 = vector.shape_cast %182 : vector<2x16x1xf32> to vector<1x2x16x1xf32>
    tpu.vector_store %arg3[%c0_35, %c2_36, %c0_37, %c0_38], %241 {strides = array<i32>} : memref<1x4x16x16xf32, #tpu.memory_space<vmem>>, vector<1x2x16x1xf32>,
    %c0_39 = arith.constant 0 : index
    %c2_40 = arith.constant 2 : index
    %c0_41 = arith.constant 0 : index
    %c1_42 = arith.constant 1 : index
    %242 = vector.load %arg3[%c0_39, %c2_40, %c0_41, %c1_42] : memref<1x4x16x16xf32, #tpu.memory_space<vmem>>, vector<1x2x16x1xf32>
    %243 = vector.shape_cast %242 : vector<1x2x16x1xf32> to vector<2x16x1xf32>
    %244 = vector.shape_cast %202 : vector<2x16x1xf32> to vector<1x2x16x1xf32>
    tpu.vector_store %arg3[%c0_39, %c2_40, %c0_41, %c1_42], %244 {strides = array<i32>} : memref<1x4x16x16xf32, #tpu.memory_space<vmem>>, vector<1x2x16x1xf32>,
    %c0_43 = arith.constant 0 : index
    %c2_44 = arith.constant 2 : index
    %c0_45 = arith.constant 0 : index
    %c14_46 = arith.constant 14 : index
    %245 = vector.load %arg3[%c0_43, %c2_44, %c0_45, %c14_46] : memref<1x4x16x16xf32, #tpu.memory_space<vmem>>, vector<1x2x16x1xf32>
    %246 = vector.shape_cast %245 : vector<1x2x16x1xf32> to vector<2x16x1xf32>
    %247 = vector.shape_cast %222 : vector<2x16x1xf32> to vector<1x2x16x1xf32>
    tpu.vector_store %arg3[%c0_43, %c2_44, %c0_45, %c14_46], %247 {strides = array<i32>} : memref<1x4x16x16xf32, #tpu.memory_space<vmem>>, vector<1x2x16x1xf32>,
    %c0_47 = arith.constant 0 : index
    %c2_48 = arith.constant 2 : index
    %c0_49 = arith.constant 0 : index
    %c15_50 = arith.constant 15 : index
    %248 = vector.load %arg3[%c0_47, %c2_48, %c0_49, %c15_50] : memref<1x4x16x16xf32, #tpu.memory_space<vmem>>, vector<1x2x16x1xf32>
    %249 = vector.shape_cast %248 : vector<1x2x16x1xf32> to vector<2x16x1xf32>
    %250 = vector.shape_cast %238 : vector<2x16x1xf32> to vector<1x2x16x1xf32>
    tpu.vector_store %arg3[%c0_47, %c2_48, %c0_49, %c15_50], %250 {strides = array<i32>} : memref<1x4x16x16xf32, #tpu.memory_space<vmem>>, vector<1x2x16x1xf32>,
    return
  }
  func.func @transform_0(%arg0: i32) -> (i32, i32) {
    %c0_i32 = arith.constant 0 : i32
    %c0_i32_0 = arith.constant 0 : i32
    %c0_i32_1 = arith.constant 0 : i32
    return %c0_i32, %c0_i32_0 : i32, i32
  }
  func.func @transform_1(%arg0: i32) -> (i32, i32, i32, i32) {
    %c0_i32 = arith.constant 0 : i32
    %c0_i32_0 = arith.constant 0 : i32
    %c0_i32_1 = arith.constant 0 : i32
    %c0_i32_2 = arith.constant 0 : i32
    return %arg0, %c0_i32, %c0_i32_0, %c0_i32_1 : i32, i32, i32, i32
  }
  func.func @transform_2(%arg0: i32) -> (i32, i32, i32, i32) {
    %c0_i32 = arith.constant 0 : i32
    %c0_i32_0 = arith.constant 0 : i32
    %c0_i32_1 = arith.constant 0 : i32
    %c0_i32_2 = arith.constant 0 : i32
    return %arg0, %c0_i32, %c0_i32_0, %c0_i32_1 : i32, i32, i32, i32
  }
}

</mosaic_0001>

<llo_original>
// kernel: tpu_custom_call.1
$region0: #{tpu_custom_call.1}
  #allocation0 [shape = 'u32[]', space=smem, size = 0x4, offset = 0x4, fixed_abs, tag = 'smem constant byte address 0x4 - core index']
  #allocation1 [shape = 'u32[72,128]{1,0:T(1,128)}', space=vmem, size = 0x9000, scoped, tag = 'internal scratch']
  %s0 = inlined_call_operand.hbm [shape: f32[4,10], index: 0, kind: input, shape index: {}]
  %s1 = inlined_call_operand.hbm [shape: f32[2,4,16,16], index: 1, kind: input, shape index: {}]
  %s2 = inlined_call_operand.hbm [shape: f32[2,4,16,16], index: 2, kind: output, shape index: {}]
  %s3 = sld [smem:[#allocation0]]
  $region49: #{tpu_custom_call.1} parent=0
    _
  %s5 = ssub.s32 1, %s3
  %s6 = scalar_select 0, %s5, %s3
  $region1: #{tpu_custom_call.1} parent=0
    #allocation2 [shape = 'u8[2048]{0}', space=vmem, size = 0x800, scoped, tag = 'input window, operand 0, single buffered']
    #allocation3 [shape = 's32[2]{0}', space=sflag, size = 0x8, scoped, tag = 'scoped memory for tpu_custom_call.1']
    #allocation4 [shape = 's32[2]{0}', space=sflag, size = 0x8, scoped, tag = 'scoped memory for tpu_custom_call.1']
    #allocation5 [shape = 'u8[65536]{0}', space=vmem, size = 0x10000, scoped, tag = 'input window, operand 1']
    #allocation6 [shape = 's32[2]{0}', space=sflag, size = 0x8, scoped, tag = 'scoped memory for tpu_custom_call.1']
    #allocation7 [shape = 'u8[65536]{0}', space=vmem, size = 0x10000, scoped, tag = 'output window, operand 0']
    %7 = vsyncpa [#allocation3], 0
    %8 = vsyncpa [#allocation6], 0
    %s9 = scalar_lea.sflag [#allocation6], 1
    %10 = vsyncpa %s9, 0
    %11 = vsyncpa [#allocation4], 0
    %s12 = scalar_lea.sflag [#allocation4], 1
    %13 = vsyncpa %s12, 0
    loop: start=0, step=1, limit=4
    $region2: #{tpu_custom_call.1} parent=1 // loop_pre_header
      _
    $region3: #{tpu_custom_call.1} parent=1 // loop_header
      %s15 = sphi 0, %s19
      %p16 = scmp.ge.s32.totalorder %s15, 4
      %s23 = sphi 0, %s23
      %s25 = sphi 0, %s23
      %s26 = sphi 0, %s25
      %s40 = sphi 0, %s26
      %s46 = sphi 0, %s48
      %s49 = sphi 0, %s46
      %s50 = sphi 0, %s49
      %s66 = sphi 0, %s50
      %s72 = sphi 0, %s74
      %s75 = sphi 0, %s72
      %s76 = sphi 0, %s75
      %s92 = sphi 0, %s76
    $region4: #{tpu_custom_call.1} parent=1 // loop_header_branch
      %18 = sbr.rel (%p16) target = $region8
    $region5: #{tpu_custom_call.1} parent=1 // loop_body
      %s20 = ssub.s32 %s15, 1
      %s21 = ssub.s32 %s15, 2
      %s22 = sadd.s32 %s15, 1
      %s24 = sadd.s32 %s23, 1
      %p27 = scmp.eq.s32.totalorder %s15, 1
      %p28 = scmp.ne.s32.totalorder %s23, %s25
      %p29 = scmp.eq.s32.totalorder %s15, 0
      %p30 = por %p28, %p29
      %p31 = scmp.ne.s32.totalorder %s23, %s25
      %p32 = scmp.eq.s32.totalorder %s20, 1
      %p33 = por %p31, %p32
      %p34 = scmp.ne.s32.totalorder %s25, %s26
      %p35 = scmp.eq.s32.totalorder %s20, 0
      %p36 = por %p34, %p35
      %p37 = scmp.ne.s32.totalorder %s25, %s26
      %p38 = scmp.eq.s32.totalorder %s21, 1
      %p39 = por %p37, %p38
      %p41 = scmp.ne.s32.totalorder %s26, %s40
      %p42 = scmp.eq.s32.totalorder %s21, 0
      %p43 = por %p41, %p42
      %s44 = ssub.s32 %s15, %s22
      %p45 = scmp.eq.s32.totalorder %s44, 0
      %s47 = sadd.s32 %s46, 1
      %s48 = scalar_select %p45, %s46, %s47
      %p51 = pneg %p45
      %p52 = scmp.eq.s32.totalorder %s15, 1
      %p53 = por %p51, %p52
      %p54 = scmp.ne.s32.totalorder %s46, %s49
      %p55 = scmp.eq.s32.totalorder %s15, 0
      %p56 = por %p54, %p55
      %p57 = scmp.ne.s32.totalorder %s46, %s49
      %p58 = scmp.eq.s32.totalorder %s20, 1
      %p59 = por %p57, %p58
      %p60 = scmp.ne.s32.totalorder %s49, %s50
      %p61 = scmp.eq.s32.totalorder %s20, 0
      %p62 = por %p60, %p61
      %p63 = scmp.ne.s32.totalorder %s49, %s50
      %p64 = scmp.eq.s32.totalorder %s21, 1
      %p65 = por %p63, %p64
      %p67 = scmp.ne.s32.totalorder %s50, %s66
      %p68 = scmp.eq.s32.totalorder %s21, 0
      %p69 = por %p67, %p68
      %s70 = ssub.s32 %s15, %s22
      %p71 = scmp.eq.s32.totalorder %s70, 0
      %s73 = sadd.s32 %s72, 1
      %s74 = scalar_select %p71, %s72, %s73
      %p77 = pneg %p71
      %p78 = scmp.eq.s32.totalorder %s15, 1
      %p79 = por %p77, %p78
      %p80 = scmp.ne.s32.totalorder %s72, %s75
      %p81 = scmp.eq.s32.totalorder %s15, 0
      %p82 = por %p80, %p81
      %p83 = scmp.ne.s32.totalorder %s72, %s75
      %p84 = scmp.eq.s32.totalorder %s20, 1
      %p85 = por %p83, %p84
      %p86 = scmp.ne.s32.totalorder %s75, %s76
      %p87 = scmp.eq.s32.totalorder %s20, 0
      %p88 = por %p86, %p87
      %p89 = scmp.ne.s32.totalorder %s75, %s76
      %p90 = scmp.eq.s32.totalorder %s21, 1
      %p91 = por %p89, %p90
      %p93 = scmp.ne.s32.totalorder %s76, %s92
      %p94 = scmp.eq.s32.totalorder %s21, 0
      %p95 = por %p93, %p94
      %p96 = scmp.le.s32.totalorder 1, %s15
      %p97 = scmp.lt.s32.totalorder %s15, 3
      %p98 = pnand %p96, %p97
      %p99 = pneg %p98
      // Predicated region
      $region9: #{tpu_custom_call.1} parent=5 // pred_check
        _
      $region10: #{tpu_custom_call.1} parent=5 // pred_check_branch
        %101 = sbr.rel (%p98) target = $region12
      $region11: #{tpu_custom_call.1} parent=5 // pred_region
        %s102 = ssub.s32 %s15, 1
        // Predicated region
        $region13: #{tpu_custom_call.1} parent=11 // pred_check
          %p103 = pneg %p36
        $region14: #{tpu_custom_call.1} parent=11 // pred_check_branch
          %105 = sbr.rel (%p103) target = $region16
        $region15: #{tpu_custom_call.1} parent=11 // pred_region
          %107 = vsyncadd [#allocation3], 0
          %s109 = sshll.u32 %s0, 4
          %s110 = int_to_ptr.hbm [resolvable:$true] %s109
          %s111 = sshll.u32 [#allocation2], 4
          %s112 = int_to_ptr.vmem [resolvable:$true] %s111
          %114 = dma.hbm_to_vmem [thread:$0]  %s110, 64, %s112, [#allocation3]
        $region16: #{tpu_custom_call.1} parent=11 // pred_fallthru
          _
      $region12: #{tpu_custom_call.1} parent=5 // pred_fallthru
        _
      %p115 = scmp.lt.s32.totalorder %s15, 2
      // Predicated region
      $region17: #{tpu_custom_call.1} parent=5 // pred_check
        %p116 = pneg %p115
      $region18: #{tpu_custom_call.1} parent=5 // pred_check_branch
        %118 = sbr.rel (%p116) target = $region20
      $region19: #{tpu_custom_call.1} parent=5 // pred_region
        // Predicated region
        $region21: #{tpu_custom_call.1} parent=19 // pred_check
          %p119 = pneg %p56
        $region22: #{tpu_custom_call.1} parent=19 // pred_check_branch
          %121 = sbr.rel (%p119) target = $region24
        $region23: #{tpu_custom_call.1} parent=19 // pred_region
          %s122 = sand.u32 %s46, 1
          %s123 = scalar_lea.sflag [#allocation6], %s122
          %s124 = sand.u32 %s46, 1
          %s125 = smul.addr %s124, 64
          %s126 = scalar_lea.vmem [#allocation5], %s125
          %128 = vsyncadd %s123, 0
          %s129 = smul.addr %s15, 8
          %s130 = smul.addr %s129, 8
          %s131 = scalar_lea.hbm %s1, %s130
          %s132 = sshll.u32 %s131, 4
          %s133 = int_to_ptr.hbm [resolvable:$true] %s132
          %s134 = sshll.u32 %s126, 4
          %s135 = int_to_ptr.vmem [resolvable:$true] %s134
          %140 = dma.hbm_to_vmem [thread:$0]  %s133, 1024, %s135, %s123, 128, 128, 8
        $region24: #{tpu_custom_call.1} parent=19 // pred_fallthru
          _
      $region20: #{tpu_custom_call.1} parent=5 // pred_fallthru
        _
      %p141 = scmp.le.s32.totalorder 1, %s15
      %p142 = scmp.lt.s32.totalorder %s15, 3
      %p143 = pnand %p141, %p142
      %p144 = pneg %p143
      // Predicated region
      $region25: #{tpu_custom_call.1} parent=5 // pred_check
        _
      $region26: #{tpu_custom_call.1} parent=5 // pred_check_branch
        %146 = sbr.rel (%p143) target = $region28
      $region27: #{tpu_custom_call.1} parent=5 // pred_region
        %s147 = ssub.s32 %s15, 1
        // Predicated region
        $region29: #{tpu_custom_call.1} parent=27 // pred_check
          %p148 = pneg %p36
        $region30: #{tpu_custom_call.1} parent=27 // pred_check_branch
          %150 = sbr.rel (%p148) target = $region32
        $region31: #{tpu_custom_call.1} parent=27 // pred_region
          %152 = dma.done [#allocation3], 64
        $region32: #{tpu_custom_call.1} parent=27 // pred_fallthru
          _
        %s153 = sand.u32 %s49, 1
        %s154 = scalar_lea.sflag [#allocation6], %s153
        %s155 = sand.u32 %s49, 1
        %s156 = smul.addr %s155, 64
        %s157 = scalar_lea.vmem [#allocation5], %s156
        // Predicated region
        $region33: #{tpu_custom_call.1} parent=27 // pred_check
          %p158 = pneg %p62
        $region34: #{tpu_custom_call.1} parent=27 // pred_check_branch
          %160 = sbr.rel (%p158) target = $region36
        $region35: #{tpu_custom_call.1} parent=27 // pred_region
          %162 = dma.done %s154, 1024
        $region36: #{tpu_custom_call.1} parent=27 // pred_fallthru
          _
        %p163 = pneg %p36
        %p164 = pneg %p33
        %s165 = sand.u32 %s49, 1
        %s166 = scalar_lea.sflag [#allocation6], %s165
        %s167 = sand.u32 %s49, 1
        %s168 = smul.addr %s167, 64
        %s169 = scalar_lea.vmem [#allocation5], %s168
        %p170 = pneg %p62
        %p171 = pneg %p59
        %p172 = pneg %p88
        %p173 = pneg %p85
        %s174 = sand.u32 %s75, 1
        %s175 = scalar_lea.sflag [#allocation4], %s174
        %s176 = sand.u32 %s75, 1
        %s177 = smul.addr %s176, 64
        %s178 = scalar_lea.vmem [#allocation7], %s177
        %v179 = vld [vmem:[%s157] sm:$0xff]
        %v180 = vld [vmem:[%s157 + $0x8] sm:$0xff]
        %v181 = vld [vmem:[%s157 + $0x10] sm:$0xff]
        %v182 = vld [vmem:[%s157 + $0x18] sm:$0xff]
        %v183 = vld [vmem:[%s157 + $0x20] sm:$0xff]
        %v184 = vld [vmem:[%s157 + $0x28] sm:$0xff]
        %v185 = vld [vmem:[%s157 + $0x30] sm:$0xff]
        %v186 = vld [vmem:[%s157 + $0x38] sm:$0xff]
        %vm187 = vcmask 130048
        %v188 = vsel %vm187, %v179, 0.0
        %189 = vadd.xlane.f32.xlu0 %v188
        %v190 = vpop.xlane.xlu0 %189
        %v191 = vsel %vm187, %v180, 0.0
        %192 = vadd.xlane.f32.xlu0 %v191
        %v193 = vpop.xlane.xlu0 %192
        %v194 = vsel %vm187, %v181, 0.0
        %195 = vadd.xlane.f32.xlu0 %v194
        %v196 = vpop.xlane.xlu0 %195
        %v197 = vsel %vm187, %v182, 0.0
        %198 = vadd.xlane.f32.xlu0 %v197
        %v199 = vpop.xlane.xlu0 %198
        %v200 = vsel %vm187, %v183, 0.0
        %201 = vadd.xlane.f32.xlu0 %v200
        %v202 = vpop.xlane.xlu0 %201
        %v203 = vsel %vm187, %v184, 0.0
        %204 = vadd.xlane.f32.xlu0 %v203
        %v205 = vpop.xlane.xlu0 %204
        %v206 = vsel %vm187, %v185, 0.0
        %207 = vadd.xlane.f32.xlu0 %v206
        %v208 = vpop.xlane.xlu0 %207
        %v209 = vsel %vm187, %v186, 0.0
        %210 = vadd.xlane.f32.xlu0 %v209
        %v211 = vpop.xlane.xlu0 %210
        %v220 = vlaneseq
        %v221 = vand.u32 %v220, 127
        %v222 = vperm.slane %v190, %v221
        %v223 = vadd.s32 %v221, 4294967288
        %v224 = vperm.slane %v193, %v223
        %vm225 = vcmask 130112
        %v226 = vsel %vm225, %v224, %v222
        %v227 = vperm.slane %v196, %v221
        %v228 = vperm.slane %v199, %v223
        %v229 = vsel %vm225, %v228, %v227
        %v230 = vperm.slane %v202, %v221
        %v231 = vperm.slane %v205, %v223
        %v232 = vsel %vm225, %v231, %v230
        %v233 = vperm.slane %v208, %v221
        %v234 = vperm.slane %v211, %v223
        %v235 = vsel %vm225, %v234, %v233
        %vm236 = vcmask 1041409
        %v237 = vsel %vm236, %v229, %v226
        %vm238 = vcmask 1042434
        %v239 = vsel %vm238, %v232, %v237
        %vm240 = vcmask 1043459
        %v241 = vsel %vm240, %v235, %v239
        %vm243 = vcmask 125952
        %v244 = vsel %vm243, %v241, 0.0
        %245 = vadd.xlane.f32.xlu0 %v244
        %v246 = vpop.xlane.xlu0 %245
        %v247 = vmul.f32 %v246, 0.00390625
        %v248 = vld [vmem:[#allocation2] sm:$0xf]
        %v249 = vmul.f32 %v247, %v248
        %vm250 = vcmask 76800
        %v251 = vsel %vm250, %v249, 0.0
        %v252 = vrot.slane %v251, 4
        %v253 = vadd.f32 %v251, %v252
        %v254 = vrot.slane %v253, 2
        %v255 = vadd.f32 %v253, %v254
        %v256 = vrot.slane %v255, 1
        %v257 = vadd.f32 %v255, %v256
        %v258 = vsub.f32 0.0, %v257
        %v259 = vmul.f32 %v258, 1.442695
        %v260 = vpow.pop %v259
        %v261 = vadd.f32 %v260, 1.0
        %v262 = vrcp.pop %v261
        %v263 = vmul.f32 %v261, %v262
        %v264 = vsub.f32 1.0, %v263
        %v265 = vmul.f32 %v262, %v264
        %v266 = vadd.f32 %v262, %v265
        %vm267 = vweird.f32 %v261
        %vm268 = vweird.f32 %v262
        %vm269 = vmor %vm267, %vm268
        %v270 = vsel %vm269, %v262, %v266
        %v271 = vand.u32 2147483647, %v261
        %vm272 = vcmp.eq.f32.partialorder %v271, 8.507059e+37
        %v273 = vand.u32 %v261, 2147483648
        %v274 = vor.u32 1.1754944e-38, %v273
        %v275 = vsel %vm272, %v274, %v270
        %v276 = vmul.f32 1.0, %v275
        %vm277 = vcmask 1047680
        %278 = vrot.lane.b32.xlu0 %v179, 16
        %v279 = vpop.permute.xlu0 %278
        %v280 = vsel %vm277, %v279, %v179
        %281 = vrot.lane.b32.xlu0 %v180, 16
        %v282 = vpop.permute.xlu0 %281
        %v283 = vsel %vm277, %v282, %v180
        %284 = vrot.lane.b32.xlu0 %v181, 16
        %v285 = vpop.permute.xlu0 %284
        %v286 = vsel %vm277, %v285, %v181
        %287 = vrot.lane.b32.xlu0 %v182, 16
        %v288 = vpop.permute.xlu0 %287
        %v289 = vsel %vm277, %v288, %v182
        %290 = vrot.lane.b32.xlu0 %v280, 16
        %v291 = vpop.permute.xlu0 %290
        %292 = vrot.lane.b32.xlu0 %v283, 16
        %v293 = vpop.permute.xlu0 %292
        %294 = vrot.lane.b32.xlu0 %v286, 16
        %v295 = vpop.permute.xlu0 %294
        %296 = vrot.lane.b32.xlu0 %v289, 16
        %v297 = vpop.permute.xlu0 %296
        %v298 = vsel %vm277, %v291, %v179
        %v299 = vsel %vm277, %v293, %v180
        %v300 = vsel %vm277, %v295, %v181
        %v301 = vsel %vm277, %v297, %v182
        %303 = vset.pattern.permute.xlu0 0
        %304 = vperm.xlu0 %303, %v276
        %v305 = vpop.permute.xlu0 %304
        %v307 = vmul.f32 %v298, %v305
        %v308 = vmul.f32 %v299, %v305
        %v309 = vmul.f32 %v300, %v305
        %v310 = vmul.f32 %v301, %v305
        %311 = vset.pattern.permute.xlu0 1
        %312 = vperm.xlu0 %311, %v276
        %v313 = vpop.permute.xlu0 %312
        %v315 = vmul.f32 %v298, %v313
        %v316 = vmul.f32 %v299, %v313
        %v317 = vmul.f32 %v300, %v313
        %v318 = vmul.f32 %v301, %v313
        %323 = vrot.lane.b32.xlu0 %v315, 127
        %v324 = vpop.permute.xlu0 %323
        %325 = vrot.lane.b32.xlu0 %v316, 127
        %v326 = vpop.permute.xlu0 %325
        %327 = vrot.lane.b32.xlu0 %v317, 127
        %v328 = vpop.permute.xlu0 %327
        %329 = vrot.lane.b32.xlu0 %v318, 127
        %v330 = vpop.permute.xlu0 %329
        %v335 = vadd.f32 %v307, %v324
        %v336 = vadd.f32 %v308, %v326
        %v337 = vadd.f32 %v309, %v328
        %v338 = vadd.f32 %v310, %v330
        %339 = vset.pattern.permute.xlu0 2
        %340 = vperm.xlu0 %339, %v276
        %v341 = vpop.permute.xlu0 %340
        %v343 = vmul.f32 %v179, %v341
        %v344 = vmul.f32 %v180, %v341
        %v345 = vmul.f32 %v181, %v341
        %v346 = vmul.f32 %v182, %v341
        %351 = vrot.lane.b32.xlu0 %v343, 14
        %v352 = vpop.permute.xlu0 %351
        %353 = vrot.lane.b32.xlu0 %v344, 14
        %v354 = vpop.permute.xlu0 %353
        %355 = vrot.lane.b32.xlu0 %v345, 14
        %v356 = vpop.permute.xlu0 %355
        %357 = vrot.lane.b32.xlu0 %v346, 14
        %v358 = vpop.permute.xlu0 %357
        %v363 = vadd.f32 %v335, %v352
        %v364 = vadd.f32 %v336, %v354
        %v365 = vadd.f32 %v337, %v356
        %v366 = vadd.f32 %v338, %v358
        %367 = vset.pattern.permute.xlu0 3
        %368 = vperm.xlu0 %367, %v276
        %v369 = vpop.permute.xlu0 %368
        %v371 = vmul.f32 %v298, %v369
        %v372 = vmul.f32 %v299, %v369
        %v373 = vmul.f32 %v300, %v369
        %v374 = vmul.f32 %v301, %v369
        %379 = vrot.lane.b32.xlu0 %v371, 13
        %v380 = vpop.permute.xlu0 %379
        %381 = vrot.lane.b32.xlu0 %v372, 13
        %v382 = vpop.permute.xlu0 %381
        %383 = vrot.lane.b32.xlu0 %v373, 13
        %v384 = vpop.permute.xlu0 %383
        %385 = vrot.lane.b32.xlu0 %v374, 13
        %v386 = vpop.permute.xlu0 %385
        %v391 = vadd.f32 %v363, %v380
        %v392 = vadd.f32 %v364, %v382
        %v393 = vadd.f32 %v365, %v384
        %v394 = vadd.f32 %v366, %v386
        %395 = vset.pattern.permute.xlu0 4
        %396 = vperm.xlu0 %395, %v276
        %v397 = vpop.permute.xlu0 %396
        %v399 = vmul.f32 %v298, %v397
        %v400 = vmul.f32 %v299, %v397
        %v401 = vmul.f32 %v300, %v397
        %v402 = vmul.f32 %v301, %v397
        %407 = vrot.lane.b32.xlu0 %v399, 12
        %v408 = vpop.permute.xlu0 %407
        %409 = vrot.lane.b32.xlu0 %v400, 12
        %v410 = vpop.permute.xlu0 %409
        %411 = vrot.lane.b32.xlu0 %v401, 12
        %v412 = vpop.permute.xlu0 %411
        %413 = vrot.lane.b32.xlu0 %v402, 12
        %v414 = vpop.permute.xlu0 %413
        %v419 = vadd.f32 %v391, %v408
        %v420 = vadd.f32 %v392, %v410
        %v421 = vadd.f32 %v393, %v412
        %v422 = vadd.f32 %v394, %v414
        %427 = vrot.lane.b32.xlu0 %v419, 114
        %v428 = vpop.permute.xlu0 %427
        %429 = vrot.lane.b32.xlu0 %v420, 114
        %v430 = vpop.permute.xlu0 %429
        %431 = vrot.lane.b32.xlu0 %v421, 114
        %v432 = vpop.permute.xlu0 %431
        %433 = vrot.lane.b32.xlu0 %v422, 114
        %v434 = vpop.permute.xlu0 %433
        %439 = vst.msk [vmem:[%s178] sm:$0xff] %vm187, %v428
        %440 = vst.msk [vmem:[%s178 + $0x8] sm:$0xff] %vm187, %v430
        %441 = vst.msk [vmem:[%s178 + $0x10] sm:$0xff] %vm187, %v432
        %442 = vst.msk [vmem:[%s178 + $0x18] sm:$0xff] %vm187, %v434
        %443 = vrot.lane.b32.xlu0 %v276, 126
        %v444 = vpop.permute.xlu0 %443
        %v446 = vadd.f32 %v276, %v444
        %447 = vrot.lane.b32.xlu0 %v276, 124
        %v448 = vpop.permute.xlu0 %447
        %v450 = vadd.f32 %v276, %v448
        %v451 = vperm.slane %v450, 0
        %453 = vrot.lane.b32.xlu0 %v451, 2
        %v454 = vpop.permute.xlu0 %453
        %v456 = vmul.f32 %v179, %v454
        %v457 = vmul.f32 %v180, %v454
        %v458 = vmul.f32 %v181, %v454
        %v459 = vmul.f32 %v182, %v454
        %v460 = vperm.slane %v446, 0
        %v461 = vmul.f32 %v179, %v460
        %v462 = vmul.f32 %v180, %v460
        %v463 = vmul.f32 %v181, %v460
        %v464 = vmul.f32 %v182, %v460
        %469 = vrot.lane.b32.xlu0 %v461, 1
        %v470 = vpop.permute.xlu0 %469
        %471 = vrot.lane.b32.xlu0 %v462, 1
        %v472 = vpop.permute.xlu0 %471
        %473 = vrot.lane.b32.xlu0 %v463, 1
        %v474 = vpop.permute.xlu0 %473
        %475 = vrot.lane.b32.xlu0 %v464, 1
        %v476 = vpop.permute.xlu0 %475
        %v481 = vadd.f32 %v456, %v470
        %v482 = vadd.f32 %v457, %v472
        %v483 = vadd.f32 %v458, %v474
        %v484 = vadd.f32 %v459, %v476
        %v485 = vmul.f32 %v179, %v444
        %v486 = vmul.f32 %v180, %v444
        %v487 = vmul.f32 %v181, %v444
        %v488 = vmul.f32 %v182, %v444
        %493 = vrot.lane.b32.xlu0 %v485, 2
        %v494 = vpop.permute.xlu0 %493
        %495 = vrot.lane.b32.xlu0 %v486, 2
        %v496 = vpop.permute.xlu0 %495
        %497 = vrot.lane.b32.xlu0 %v487, 2
        %v498 = vpop.permute.xlu0 %497
        %499 = vrot.lane.b32.xlu0 %v488, 2
        %v500 = vpop.permute.xlu0 %499
        %v505 = vadd.f32 %v481, %v494
        %v506 = vadd.f32 %v482, %v496
        %v507 = vadd.f32 %v483, %v498
        %v508 = vadd.f32 %v484, %v500
        %510 = vrot.lane.b32.xlu0 %v460, 1
        %v511 = vpop.permute.xlu0 %510
        %v513 = vmul.f32 %v179, %v511
        %v514 = vmul.f32 %v180, %v511
        %v515 = vmul.f32 %v181, %v511
        %v516 = vmul.f32 %v182, %v511
        %517 = vrot.lane.b32.xlu0 %v276, 127
        %v518 = vpop.permute.xlu0 %517
        %v520 = vmul.f32 %v179, %v518
        %v521 = vmul.f32 %v180, %v518
        %v522 = vmul.f32 %v181, %v518
        %v523 = vmul.f32 %v182, %v518
        %528 = vrot.lane.b32.xlu0 %v520, 1
        %v529 = vpop.permute.xlu0 %528
        %530 = vrot.lane.b32.xlu0 %v521, 1
        %v531 = vpop.permute.xlu0 %530
        %532 = vrot.lane.b32.xlu0 %v522, 1
        %v533 = vpop.permute.xlu0 %532
        %534 = vrot.lane.b32.xlu0 %v523, 1
        %v535 = vpop.permute.xlu0 %534
        %v540 = vadd.f32 %v513, %v529
        %v541 = vadd.f32 %v514, %v531
        %v542 = vadd.f32 %v515, %v533
        %v543 = vadd.f32 %v516, %v535
        %544 = vrot.lane.b32.xlu0 %v520, 127
        %v545 = vpop.permute.xlu0 %544
        %546 = vrot.lane.b32.xlu0 %v521, 127
        %v547 = vpop.permute.xlu0 %546
        %548 = vrot.lane.b32.xlu0 %v522, 127
        %v549 = vpop.permute.xlu0 %548
        %550 = vrot.lane.b32.xlu0 %v523, 127
        %v551 = vpop.permute.xlu0 %550
        %v556 = vadd.f32 %v540, %v545
        %v557 = vadd.f32 %v541, %v547
        %v558 = vadd.f32 %v542, %v549
        %v559 = vadd.f32 %v543, %v551
        %560 = vrot.lane.b32.xlu0 %v520, 126
        %v561 = vpop.permute.xlu0 %560
        %562 = vrot.lane.b32.xlu0 %v521, 126
        %v563 = vpop.permute.xlu0 %562
        %564 = vrot.lane.b32.xlu0 %v522, 126
        %v565 = vpop.permute.xlu0 %564
        %566 = vrot.lane.b32.xlu0 %v523, 126
        %v567 = vpop.permute.xlu0 %566
        %v572 = vadd.f32 %v556, %v561
        %v573 = vadd.f32 %v557, %v563
        %v574 = vadd.f32 %v558, %v565
        %v575 = vadd.f32 %v559, %v567
        %576 = vrot.lane.b32.xlu0 %v276, 12
        %v577 = vpop.permute.xlu0 %576
        %v579 = vmul.f32 %v179, %v577
        %v580 = vmul.f32 %v180, %v577
        %v581 = vmul.f32 %v181, %v577
        %v582 = vmul.f32 %v182, %v577
        %587 = vrot.lane.b32.xlu0 %v579, 127
        %v588 = vpop.permute.xlu0 %587
        %589 = vrot.lane.b32.xlu0 %v580, 127
        %v590 = vpop.permute.xlu0 %589
        %591 = vrot.lane.b32.xlu0 %v581, 127
        %v592 = vpop.permute.xlu0 %591
        %593 = vrot.lane.b32.xlu0 %v582, 127
        %v594 = vpop.permute.xlu0 %593
        %v599 = vadd.f32 %v579, %v588
        %v600 = vadd.f32 %v580, %v590
        %v601 = vadd.f32 %v581, %v592
        %v602 = vadd.f32 %v582, %v594
        %603 = vrot.lane.b32.xlu0 %v460, 12
        %v604 = vpop.permute.xlu0 %603
        %v606 = vmul.f32 %v179, %v604
        %v607 = vmul.f32 %v180, %v604
        %v608 = vmul.f32 %v181, %v604
        %v609 = vmul.f32 %v182, %v604
        %614 = vrot.lane.b32.xlu0 %v606, 126
        %v615 = vpop.permute.xlu0 %614
        %616 = vrot.lane.b32.xlu0 %v607, 126
        %v617 = vpop.permute.xlu0 %616
        %618 = vrot.lane.b32.xlu0 %v608, 126
        %v619 = vpop.permute.xlu0 %618
        %620 = vrot.lane.b32.xlu0 %v609, 126
        %v621 = vpop.permute.xlu0 %620
        %v626 = vadd.f32 %v599, %v615
        %v627 = vadd.f32 %v600, %v617
        %v628 = vadd.f32 %v601, %v619
        %v629 = vadd.f32 %v602, %v621
        %630 = vrot.lane.b32.xlu0 %v579, 125
        %v631 = vpop.permute.xlu0 %630
        %632 = vrot.lane.b32.xlu0 %v580, 125
        %v633 = vpop.permute.xlu0 %632
        %634 = vrot.lane.b32.xlu0 %v581, 125
        %v635 = vpop.permute.xlu0 %634
        %636 = vrot.lane.b32.xlu0 %v582, 125
        %v637 = vpop.permute.xlu0 %636
        %v642 = vadd.f32 %v626, %v631
        %v643 = vadd.f32 %v627, %v633
        %v644 = vadd.f32 %v628, %v635
        %v645 = vadd.f32 %v629, %v637
        %646 = vrot.lane.b32.xlu0 %v451, 13
        %v647 = vpop.permute.xlu0 %646
        %v649 = vmul.f32 %v179, %v647
        %v650 = vmul.f32 %v180, %v647
        %v651 = vmul.f32 %v181, %v647
        %v652 = vmul.f32 %v182, %v647
        %653 = vrot.lane.b32.xlu0 %v460, 13
        %v654 = vpop.permute.xlu0 %653
        %v656 = vmul.f32 %v179, %v654
        %v657 = vmul.f32 %v180, %v654
        %v658 = vmul.f32 %v181, %v654
        %v659 = vmul.f32 %v182, %v654
        %664 = vrot.lane.b32.xlu0 %v656, 127
        %v665 = vpop.permute.xlu0 %664
        %666 = vrot.lane.b32.xlu0 %v657, 127
        %v667 = vpop.permute.xlu0 %666
        %668 = vrot.lane.b32.xlu0 %v658, 127
        %v669 = vpop.permute.xlu0 %668
        %670 = vrot.lane.b32.xlu0 %v659, 127
        %v671 = vpop.permute.xlu0 %670
        %v676 = vadd.f32 %v649, %v665
        %v677 = vadd.f32 %v650, %v667
        %v678 = vadd.f32 %v651, %v669
        %v679 = vadd.f32 %v652, %v671
        %680 = vrot.lane.b32.xlu0 %v276, 13
        %v681 = vpop.permute.xlu0 %680
        %v683 = vmul.f32 %v179, %v681
        %v684 = vmul.f32 %v180, %v681
        %v685 = vmul.f32 %v181, %v681
        %v686 = vmul.f32 %v182, %v681
        %691 = vrot.lane.b32.xlu0 %v683, 126
        %v692 = vpop.permute.xlu0 %691
        %693 = vrot.lane.b32.xlu0 %v684, 126
        %v694 = vpop.permute.xlu0 %693
        %695 = vrot.lane.b32.xlu0 %v685, 126
        %v696 = vpop.permute.xlu0 %695
        %697 = vrot.lane.b32.xlu0 %v686, 126
        %v698 = vpop.permute.xlu0 %697
        %v703 = vadd.f32 %v676, %v692
        %v704 = vadd.f32 %v677, %v694
        %v705 = vadd.f32 %v678, %v696
        %v706 = vadd.f32 %v679, %v698
        %711 = vrot.lane.b32.xlu0 %v505, 126
        %v712 = vpop.permute.xlu0 %711
        %713 = vrot.lane.b32.xlu0 %v506, 126
        %v714 = vpop.permute.xlu0 %713
        %715 = vrot.lane.b32.xlu0 %v507, 126
        %v716 = vpop.permute.xlu0 %715
        %717 = vrot.lane.b32.xlu0 %v508, 126
        %v718 = vpop.permute.xlu0 %717
        %vm723 = vcmask 7168
        %724 = vst.msk [vmem:[%s178] sm:$0xff] %vm723, %v712
        %725 = vst.msk [vmem:[%s178 + $0x8] sm:$0xff] %vm723, %v714
        %726 = vst.msk [vmem:[%s178 + $0x10] sm:$0xff] %vm723, %v716
        %727 = vst.msk [vmem:[%s178 + $0x18] sm:$0xff] %vm723, %v718
        %vm728 = vcmask 15368
        %729 = vst.msk [vmem:[%s178] sm:$0xff] %vm728, %v572
        %730 = vst.msk [vmem:[%s178 + $0x8] sm:$0xff] %vm728, %v573
        %731 = vst.msk [vmem:[%s178 + $0x10] sm:$0xff] %vm728, %v574
        %732 = vst.msk [vmem:[%s178 + $0x18] sm:$0xff] %vm728, %v575
        %737 = vrot.lane.b32.xlu0 %v642, 2
        %v738 = vpop.permute.xlu0 %737
        %739 = vrot.lane.b32.xlu0 %v643, 2
        %v740 = vpop.permute.xlu0 %739
        %741 = vrot.lane.b32.xlu0 %v644, 2
        %v742 = vpop.permute.xlu0 %741
        %743 = vrot.lane.b32.xlu0 %v645, 2
        %v744 = vpop.permute.xlu0 %743
        %vm749 = vcmask 121968
        %750 = vst.msk [vmem:[%s178] sm:$0xff] %vm749, %v738
        %751 = vst.msk [vmem:[%s178 + $0x8] sm:$0xff] %vm749, %v740
        %752 = vst.msk [vmem:[%s178 + $0x10] sm:$0xff] %vm749, %v742
        %753 = vst.msk [vmem:[%s178 + $0x18] sm:$0xff] %vm749, %v744
        %758 = vrot.lane.b32.xlu0 %v703, 2
        %v759 = vpop.permute.xlu0 %758
        %760 = vrot.lane.b32.xlu0 %v704, 2
        %v761 = vpop.permute.xlu0 %760
        %762 = vrot.lane.b32.xlu0 %v705, 2
        %v763 = vpop.permute.xlu0 %762
        %764 = vrot.lane.b32.xlu0 %v706, 2
        %v765 = vpop.permute.xlu0 %764
        %vm770 = vcmask 130168
        %771 = vst.msk [vmem:[%s178] sm:$0xff] %vm770, %v759
        %772 = vst.msk [vmem:[%s178 + $0x8] sm:$0xff] %vm770, %v761
        %773 = vst.msk [vmem:[%s178 + $0x10] sm:$0xff] %vm770, %v763
        %774 = vst.msk [vmem:[%s178 + $0x18] sm:$0xff] %vm770, %v765
        %775 = vrot.lane.b32.xlu0 %v183, 16
        %v776 = vpop.permute.xlu0 %775
        %v777 = vsel %vm277, %v776, %v183
        %778 = vrot.lane.b32.xlu0 %v184, 16
        %v779 = vpop.permute.xlu0 %778
        %v780 = vsel %vm277, %v779, %v184
        %781 = vrot.lane.b32.xlu0 %v185, 16
        %v782 = vpop.permute.xlu0 %781
        %v783 = vsel %vm277, %v782, %v185
        %784 = vrot.lane.b32.xlu0 %v186, 16
        %v785 = vpop.permute.xlu0 %784
        %v786 = vsel %vm277, %v785, %v186
        %787 = vrot.lane.b32.xlu0 %v777, 16
        %v788 = vpop.permute.xlu0 %787
        %789 = vrot.lane.b32.xlu0 %v780, 16
        %v790 = vpop.permute.xlu0 %789
        %791 = vrot.lane.b32.xlu0 %v783, 16
        %v792 = vpop.permute.xlu0 %791
        %793 = vrot.lane.b32.xlu0 %v786, 16
        %v794 = vpop.permute.xlu0 %793
        %v795 = vsel %vm277, %v788, %v183
        %v796 = vsel %vm277, %v790, %v184
        %v797 = vsel %vm277, %v792, %v185
        %v798 = vsel %vm277, %v794, %v186
        %799 = vset.pattern.permute.xlu0 5
        %800 = vperm.xlu0 %799, %v276
        %v801 = vpop.permute.xlu0 %800
        %v803 = vmul.f32 %v795, %v801
        %v804 = vmul.f32 %v796, %v801
        %v805 = vmul.f32 %v797, %v801
        %v806 = vmul.f32 %v798, %v801
        %807 = vset.pattern.permute.xlu0 6
        %808 = vperm.xlu0 %807, %v276
        %v809 = vpop.permute.xlu0 %808
        %v811 = vmul.f32 %v795, %v809
        %v812 = vmul.f32 %v796, %v809
        %v813 = vmul.f32 %v797, %v809
        %v814 = vmul.f32 %v798, %v809
        %819 = vrot.lane.b32.xlu0 %v811, 127
        %v820 = vpop.permute.xlu0 %819
        %821 = vrot.lane.b32.xlu0 %v812, 127
        %v822 = vpop.permute.xlu0 %821
        %823 = vrot.lane.b32.xlu0 %v813, 127
        %v824 = vpop.permute.xlu0 %823
        %825 = vrot.lane.b32.xlu0 %v814, 127
        %v826 = vpop.permute.xlu0 %825
        %v831 = vadd.f32 %v803, %v820
        %v832 = vadd.f32 %v804, %v822
        %v833 = vadd.f32 %v805, %v824
        %v834 = vadd.f32 %v806, %v826
        %835 = vset.pattern.permute.xlu0 7
        %836 = vperm.xlu0 %835, %v276
        %v837 = vpop.permute.xlu0 %836
        %v839 = vmul.f32 %v183, %v837
        %v840 = vmul.f32 %v184, %v837
        %v841 = vmul.f32 %v185, %v837
        %v842 = vmul.f32 %v186, %v837
        %847 = vrot.lane.b32.xlu0 %v839, 14
        %v848 = vpop.permute.xlu0 %847
        %849 = vrot.lane.b32.xlu0 %v840, 14
        %v850 = vpop.permute.xlu0 %849
        %851 = vrot.lane.b32.xlu0 %v841, 14
        %v852 = vpop.permute.xlu0 %851
        %853 = vrot.lane.b32.xlu0 %v842, 14
        %v854 = vpop.permute.xlu0 %853
        %v859 = vadd.f32 %v831, %v848
        %v860 = vadd.f32 %v832, %v850
        %v861 = vadd.f32 %v833, %v852
        %v862 = vadd.f32 %v834, %v854
        %863 = vset.pattern.permute.xlu0 8
        %864 = vperm.xlu0 %863, %v276
        %v865 = vpop.permute.xlu0 %864
        %v867 = vmul.f32 %v795, %v865
        %v868 = vmul.f32 %v796, %v865
        %v869 = vmul.f32 %v797, %v865
        %v870 = vmul.f32 %v798, %v865
        %875 = vrot.lane.b32.xlu0 %v867, 13
        %v876 = vpop.permute.xlu0 %875
        %877 = vrot.lane.b32.xlu0 %v868, 13
        %v878 = vpop.permute.xlu0 %877
        %879 = vrot.lane.b32.xlu0 %v869, 13
        %v880 = vpop.permute.xlu0 %879
        %881 = vrot.lane.b32.xlu0 %v870, 13
        %v882 = vpop.permute.xlu0 %881
        %v887 = vadd.f32 %v859, %v876
        %v888 = vadd.f32 %v860, %v878
        %v889 = vadd.f32 %v861, %v880
        %v890 = vadd.f32 %v862, %v882
        %891 = vset.pattern.permute.xlu0 9
        %892 = vperm.xlu0 %891, %v276
        %v893 = vpop.permute.xlu0 %892
        %v895 = vmul.f32 %v795, %v893
        %v896 = vmul.f32 %v796, %v893
        %v897 = vmul.f32 %v797, %v893
        %v898 = vmul.f32 %v798, %v893
        %903 = vrot.lane.b32.xlu0 %v895, 12
        %v904 = vpop.permute.xlu0 %903
        %905 = vrot.lane.b32.xlu0 %v896, 12
        %v906 = vpop.permute.xlu0 %905
        %907 = vrot.lane.b32.xlu0 %v897, 12
        %v908 = vpop.permute.xlu0 %907
        %909 = vrot.lane.b32.xlu0 %v898, 12
        %v910 = vpop.permute.xlu0 %909
        %v915 = vadd.f32 %v887, %v904
        %v916 = vadd.f32 %v888, %v906
        %v917 = vadd.f32 %v889, %v908
        %v918 = vadd.f32 %v890, %v910
        %923 = vrot.lane.b32.xlu0 %v915, 114
        %v924 = vpop.permute.xlu0 %923
        %925 = vrot.lane.b32.xlu0 %v916, 114
        %v926 = vpop.permute.xlu0 %925
        %927 = vrot.lane.b32.xlu0 %v917, 114
        %v928 = vpop.permute.xlu0 %927
        %929 = vrot.lane.b32.xlu0 %v918, 114
        %v930 = vpop.permute.xlu0 %929
        %s935 = scalar_lea.vmem %s178, 32 [#allocation7]
        %936 = vst.msk [vmem:[%s935] sm:$0xff] %vm187, %v924
        %937 = vst.msk [vmem:[%s935 + $0x8] sm:$0xff] %vm187, %v926
        %938 = vst.msk [vmem:[%s935 + $0x10] sm:$0xff] %vm187, %v928
        %939 = vst.msk [vmem:[%s935 + $0x18] sm:$0xff] %vm187, %v930
        %940 = vrot.lane.b32.xlu0 %v451, 125
        %v941 = vpop.permute.xlu0 %940
        %v943 = vmul.f32 %v183, %v941
        %v944 = vmul.f32 %v184, %v941
        %v945 = vmul.f32 %v185, %v941
        %v946 = vmul.f32 %v186, %v941
        %947 = vrot.lane.b32.xlu0 %v460, 123
        %v948 = vpop.permute.xlu0 %947
        %v950 = vmul.f32 %v183, %v948
        %v951 = vmul.f32 %v184, %v948
        %v952 = vmul.f32 %v185, %v948
        %v953 = vmul.f32 %v186, %v948
        %958 = vrot.lane.b32.xlu0 %v950, 1
        %v959 = vpop.permute.xlu0 %958
        %960 = vrot.lane.b32.xlu0 %v951, 1
        %v961 = vpop.permute.xlu0 %960
        %962 = vrot.lane.b32.xlu0 %v952, 1
        %v963 = vpop.permute.xlu0 %962
        %964 = vrot.lane.b32.xlu0 %v953, 1
        %v965 = vpop.permute.xlu0 %964
        %v970 = vadd.f32 %v943, %v959
        %v971 = vadd.f32 %v944, %v961
        %v972 = vadd.f32 %v945, %v963
        %v973 = vadd.f32 %v946, %v965
        %974 = vrot.lane.b32.xlu0 %v276, 121
        %v975 = vpop.permute.xlu0 %974
        %v977 = vmul.f32 %v183, %v975
        %v978 = vmul.f32 %v184, %v975
        %v979 = vmul.f32 %v185, %v975
        %v980 = vmul.f32 %v186, %v975
        %985 = vrot.lane.b32.xlu0 %v977, 2
        %v986 = vpop.permute.xlu0 %985
        %987 = vrot.lane.b32.xlu0 %v978, 2
        %v988 = vpop.permute.xlu0 %987
        %989 = vrot.lane.b32.xlu0 %v979, 2
        %v990 = vpop.permute.xlu0 %989
        %991 = vrot.lane.b32.xlu0 %v980, 2
        %v992 = vpop.permute.xlu0 %991
        %v997 = vadd.f32 %v970, %v986
        %v998 = vadd.f32 %v971, %v988
        %v999 = vadd.f32 %v972, %v990
        %v1000 = vadd.f32 %v973, %v992
        %1001 = vrot.lane.b32.xlu0 %v460, 124
        %v1002 = vpop.permute.xlu0 %1001
        %v1004 = vmul.f32 %v183, %v1002
        %v1005 = vmul.f32 %v184, %v1002
        %v1006 = vmul.f32 %v185, %v1002
        %v1007 = vmul.f32 %v186, %v1002
        %1008 = vrot.lane.b32.xlu0 %v276, 122
        %v1009 = vpop.permute.xlu0 %1008
        %v1011 = vmul.f32 %v183, %v1009
        %v1012 = vmul.f32 %v184, %v1009
        %v1013 = vmul.f32 %v185, %v1009
        %v1014 = vmul.f32 %v186, %v1009
        %1019 = vrot.lane.b32.xlu0 %v1011, 1
        %v1020 = vpop.permute.xlu0 %1019
        %1021 = vrot.lane.b32.xlu0 %v1012, 1
        %v1022 = vpop.permute.xlu0 %1021
        %1023 = vrot.lane.b32.xlu0 %v1013, 1
        %v1024 = vpop.permute.xlu0 %1023
        %1025 = vrot.lane.b32.xlu0 %v1014, 1
        %v1026 = vpop.permute.xlu0 %1025
        %v1031 = vadd.f32 %v1004, %v1020
        %v1032 = vadd.f32 %v1005, %v1022
        %v1033 = vadd.f32 %v1006, %v1024
        %v1034 = vadd.f32 %v1007, %v1026
        %1035 = vrot.lane.b32.xlu0 %v1011, 127
        %v1036 = vpop.permute.xlu0 %1035
        %1037 = vrot.lane.b32.xlu0 %v1012, 127
        %v1038 = vpop.permute.xlu0 %1037
        %1039 = vrot.lane.b32.xlu0 %v1013, 127
        %v1040 = vpop.permute.xlu0 %1039
        %1041 = vrot.lane.b32.xlu0 %v1014, 127
        %v1042 = vpop.permute.xlu0 %1041
        %v1047 = vadd.f32 %v1031, %v1036
        %v1048 = vadd.f32 %v1032, %v1038
        %v1049 = vadd.f32 %v1033, %v1040
        %v1050 = vadd.f32 %v1034, %v1042
        %1051 = vrot.lane.b32.xlu0 %v1011, 126
        %v1052 = vpop.permute.xlu0 %1051
        %1053 = vrot.lane.b32.xlu0 %v1012, 126
        %v1054 = vpop.permute.xlu0 %1053
        %1055 = vrot.lane.b32.xlu0 %v1013, 126
        %v1056 = vpop.permute.xlu0 %1055
        %1057 = vrot.lane.b32.xlu0 %v1014, 126
        %v1058 = vpop.permute.xlu0 %1057
        %v1063 = vadd.f32 %v1047, %v1052
        %v1064 = vadd.f32 %v1048, %v1054
        %v1065 = vadd.f32 %v1049, %v1056
        %v1066 = vadd.f32 %v1050, %v1058
        %1067 = vrot.lane.b32.xlu0 %v276, 7
        %v1068 = vpop.permute.xlu0 %1067
        %v1070 = vmul.f32 %v183, %v1068
        %v1071 = vmul.f32 %v184, %v1068
        %v1072 = vmul.f32 %v185, %v1068
        %v1073 = vmul.f32 %v186, %v1068
        %1078 = vrot.lane.b32.xlu0 %v1070, 127
        %v1079 = vpop.permute.xlu0 %1078
        %1080 = vrot.lane.b32.xlu0 %v1071, 127
        %v1081 = vpop.permute.xlu0 %1080
        %1082 = vrot.lane.b32.xlu0 %v1072, 127
        %v1083 = vpop.permute.xlu0 %1082
        %1084 = vrot.lane.b32.xlu0 %v1073, 127
        %v1085 = vpop.permute.xlu0 %1084
        %v1090 = vadd.f32 %v1070, %v1079
        %v1091 = vadd.f32 %v1071, %v1081
        %v1092 = vadd.f32 %v1072, %v1083
        %v1093 = vadd.f32 %v1073, %v1085
        %1094 = vrot.lane.b32.xlu0 %v460, 7
        %v1095 = vpop.permute.xlu0 %1094
        %v1097 = vmul.f32 %v183, %v1095
        %v1098 = vmul.f32 %v184, %v1095
        %v1099 = vmul.f32 %v185, %v1095
        %v1100 = vmul.f32 %v186, %v1095
        %1105 = vrot.lane.b32.xlu0 %v1097, 126
        %v1106 = vpop.permute.xlu0 %1105
        %1107 = vrot.lane.b32.xlu0 %v1098, 126
        %v1108 = vpop.permute.xlu0 %1107
        %1109 = vrot.lane.b32.xlu0 %v1099, 126
        %v1110 = vpop.permute.xlu0 %1109
        %1111 = vrot.lane.b32.xlu0 %v1100, 126
        %v1112 = vpop.permute.xlu0 %1111
        %v1117 = vadd.f32 %v1090, %v1106
        %v1118 = vadd.f32 %v1091, %v1108
        %v1119 = vadd.f32 %v1092, %v1110
        %v1120 = vadd.f32 %v1093, %v1112
        %1121 = vrot.lane.b32.xlu0 %v1070, 125
        %v1122 = vpop.permute.xlu0 %1121
        %1123 = vrot.lane.b32.xlu0 %v1071, 125
        %v1124 = vpop.permute.xlu0 %1123
        %1125 = vrot.lane.b32.xlu0 %v1072, 125
        %v1126 = vpop.permute.xlu0 %1125
        %1127 = vrot.lane.b32.xlu0 %v1073, 125
        %v1128 = vpop.permute.xlu0 %1127
        %v1133 = vadd.f32 %v1117, %v1122
        %v1134 = vadd.f32 %v1118, %v1124
        %v1135 = vadd.f32 %v1119, %v1126
        %v1136 = vadd.f32 %v1120, %v1128
        %1137 = vrot.lane.b32.xlu0 %v451, 8
        %v1138 = vpop.permute.xlu0 %1137
        %v1140 = vmul.f32 %v183, %v1138
        %v1141 = vmul.f32 %v184, %v1138
        %v1142 = vmul.f32 %v185, %v1138
        %v1143 = vmul.f32 %v186, %v1138
        %1144 = vrot.lane.b32.xlu0 %v460, 8
        %v1145 = vpop.permute.xlu0 %1144
        %v1147 = vmul.f32 %v183, %v1145
        %v1148 = vmul.f32 %v184, %v1145
        %v1149 = vmul.f32 %v185, %v1145
        %v1150 = vmul.f32 %v186, %v1145
        %1155 = vrot.lane.b32.xlu0 %v1147, 127
        %v1156 = vpop.permute.xlu0 %1155
        %1157 = vrot.lane.b32.xlu0 %v1148, 127
        %v1158 = vpop.permute.xlu0 %1157
        %1159 = vrot.lane.b32.xlu0 %v1149, 127
        %v1160 = vpop.permute.xlu0 %1159
        %1161 = vrot.lane.b32.xlu0 %v1150, 127
        %v1162 = vpop.permute.xlu0 %1161
        %v1167 = vadd.f32 %v1140, %v1156
        %v1168 = vadd.f32 %v1141, %v1158
        %v1169 = vadd.f32 %v1142, %v1160
        %v1170 = vadd.f32 %v1143, %v1162
        %1171 = vrot.lane.b32.xlu0 %v276, 8
        %v1172 = vpop.permute.xlu0 %1171
        %v1174 = vmul.f32 %v183, %v1172
        %v1175 = vmul.f32 %v184, %v1172
        %v1176 = vmul.f32 %v185, %v1172
        %v1177 = vmul.f32 %v186, %v1172
        %1182 = vrot.lane.b32.xlu0 %v1174, 126
        %v1183 = vpop.permute.xlu0 %1182
        %1184 = vrot.lane.b32.xlu0 %v1175, 126
        %v1185 = vpop.permute.xlu0 %1184
        %1186 = vrot.lane.b32.xlu0 %v1176, 126
        %v1187 = vpop.permute.xlu0 %1186
        %1188 = vrot.lane.b32.xlu0 %v1177, 126
        %v1189 = vpop.permute.xlu0 %1188
        %v1194 = vadd.f32 %v1167, %v1183
        %v1195 = vadd.f32 %v1168, %v1185
        %v1196 = vadd.f32 %v1169, %v1187
        %v1197 = vadd.f32 %v1170, %v1189
        %1202 = vrot.lane.b32.xlu0 %v997, 126
        %v1203 = vpop.permute.xlu0 %1202
        %1204 = vrot.lane.b32.xlu0 %v998, 126
        %v1205 = vpop.permute.xlu0 %1204
        %1206 = vrot.lane.b32.xlu0 %v999, 126
        %v1207 = vpop.permute.xlu0 %1206
        %1208 = vrot.lane.b32.xlu0 %v1000, 126
        %v1209 = vpop.permute.xlu0 %1208
        %1214 = vst.msk [vmem:[%s935] sm:$0xff] %vm723, %v1203
        %1215 = vst.msk [vmem:[%s935 + $0x8] sm:$0xff] %vm723, %v1205
        %1216 = vst.msk [vmem:[%s935 + $0x10] sm:$0xff] %vm723, %v1207
        %1217 = vst.msk [vmem:[%s935 + $0x18] sm:$0xff] %vm723, %v1209
        %1218 = vst.msk [vmem:[%s935] sm:$0xff] %vm728, %v1063
        %1219 = vst.msk [vmem:[%s935 + $0x8] sm:$0xff] %vm728, %v1064
        %1220 = vst.msk [vmem:[%s935 + $0x10] sm:$0xff] %vm728, %v1065
        %1221 = vst.msk [vmem:[%s935 + $0x18] sm:$0xff] %vm728, %v1066
        %1226 = vrot.lane.b32.xlu0 %v1133, 2
        %v1227 = vpop.permute.xlu0 %1226
        %1228 = vrot.lane.b32.xlu0 %v1134, 2
        %v1229 = vpop.permute.xlu0 %1228
        %1230 = vrot.lane.b32.xlu0 %v1135, 2
        %v1231 = vpop.permute.xlu0 %1230
        %1232 = vrot.lane.b32.xlu0 %v1136, 2
        %v1233 = vpop.permute.xlu0 %1232
        %1238 = vst.msk [vmem:[%s935] sm:$0xff] %vm749, %v1227
        %1239 = vst.msk [vmem:[%s935 + $0x8] sm:$0xff] %vm749, %v1229
        %1240 = vst.msk [vmem:[%s935 + $0x10] sm:$0xff] %vm749, %v1231
        %1241 = vst.msk [vmem:[%s935 + $0x18] sm:$0xff] %vm749, %v1233
        %1246 = vrot.lane.b32.xlu0 %v1194, 2
        %v1247 = vpop.permute.xlu0 %1246
        %1248 = vrot.lane.b32.xlu0 %v1195, 2
        %v1249 = vpop.permute.xlu0 %1248
        %1250 = vrot.lane.b32.xlu0 %v1196, 2
        %v1251 = vpop.permute.xlu0 %1250
        %1252 = vrot.lane.b32.xlu0 %v1197, 2
        %v1253 = vpop.permute.xlu0 %1252
        %1258 = vst.msk [vmem:[%s935] sm:$0xff] %vm770, %v1247
        %1259 = vst.msk [vmem:[%s935 + $0x8] sm:$0xff] %vm770, %v1249
        %1260 = vst.msk [vmem:[%s935 + $0x10] sm:$0xff] %vm770, %v1251
        %1261 = vst.msk [vmem:[%s935 + $0x18] sm:$0xff] %vm770, %v1253
        %s1262 = sand.u32 %s75, 1
        %s1263 = scalar_lea.sflag [#allocation4], %s1262
        %s1264 = sand.u32 %s75, 1
        %s1265 = smul.addr %s1264, 64
        %s1266 = scalar_lea.vmem [#allocation7], %s1265
        // Predicated region
        $region37: #{tpu_custom_call.1} parent=27 // pred_check
          %p1267 = pneg %p85
        $region38: #{tpu_custom_call.1} parent=27 // pred_check_branch
          %1269 = sbr.rel (%p1267) target = $region40
        $region39: #{tpu_custom_call.1} parent=27 // pred_region
          %1271 = vsyncadd %s1263, 0
          %s1272 = smul.addr %s20, 8
          %s1273 = smul.addr %s1272, 8
          %s1274 = scalar_lea.hbm %s2, %s1273
          %s1275 = sshll.u32 %s1266, 4
          %s1276 = int_to_ptr.vmem [resolvable:$true] %s1275
          %s1277 = sshll.u32 %s1274, 4
          %s1278 = int_to_ptr.hbm [resolvable:$true] %s1277
          %1283 = dma.vmem_to_hbm [thread:$0]  %s1276, 1024, %s1278, %s1263, 128, 128, 8
        $region40: #{tpu_custom_call.1} parent=27 // pred_fallthru
          _
      $region28: #{tpu_custom_call.1} parent=5 // pred_fallthru
        _
      %p1284 = scmp.le.s32.totalorder 2, %s15
      // Predicated region
      $region41: #{tpu_custom_call.1} parent=5 // pred_check
        %p1285 = pneg %p1284
      $region42: #{tpu_custom_call.1} parent=5 // pred_check_branch
        %1287 = sbr.rel (%p1285) target = $region44
      $region43: #{tpu_custom_call.1} parent=5 // pred_region
        %s1288 = ssub.s32 %s15, 2
        // Predicated region
        $region45: #{tpu_custom_call.1} parent=43 // pred_check
          %p1289 = pneg %p91
        $region46: #{tpu_custom_call.1} parent=43 // pred_check_branch
          %1291 = sbr.rel (%p1289) target = $region48
        $region47: #{tpu_custom_call.1} parent=43 // pred_region
          %s1292 = sand.u32 %s76, 1
          %s1293 = scalar_lea.sflag [#allocation4], %s1292
          %s1294 = sand.u32 %s76, 1
          %s1295 = smul.addr %s1294, 64
          %s1296 = scalar_lea.vmem [#allocation7], %s1295
          %1298 = dma.done %s1293, 1024
        $region48: #{tpu_custom_call.1} parent=43 // pred_fallthru
          _
      $region44: #{tpu_custom_call.1} parent=5 // pred_fallthru
        _
    $region6: #{tpu_custom_call.1} parent=1 // loop_footer
      %s19 = sadd.s32 1, %s15
    $region7: #{tpu_custom_call.1} parent=1 // loop_footer_branch
      %14 = sbr.rel target = $region3
    $region8: #{tpu_custom_call.1} parent=1 // loop_exit
      _
    %1299 = vsyncpa [#allocation3], 1
    %s1300 = scalar_lea.sflag [#allocation3], 1
    %1301 = vsyncpa %s1300, 1
    %1302 = vsyncpa [#allocation6], 1
    %s1303 = scalar_lea.sflag [#allocation6], 1
    %1304 = vsyncpa %s1303, 1
    %1305 = vsyncpa [#allocation4], 1
    %s1306 = scalar_lea.sflag [#allocation4], 1
    %1307 = vsyncpa %s1306, 1

</llo_original>
